<compile_context>
chip_gen: v5e
topology: v5e:2x2
jax: 0.10.0
libtpu: 0.0.40
codegen_flags: <defaults>
</compile_context>

<pallas_src>
import functools

import jax
import jax.numpy as jnp
from jax.experimental import pallas as pl
from jax.experimental.pallas import tpu as pltpu

EPS = 1e-5


def _dilated_conv_block(h, w_ref, b_ref, masks, *, H, W, d):
    """3x3 dilated conv (padding=d, dilation=d) + folded-BN bias + ReLU.

    h:      (c_in, H*W) f32, channels on sublanes, flattened pixels on lanes.
    w_ref:  (9, c_out, c_in) folded tap weights, tap order (ky, kx) row-major.
    b_ref:  (c_out, 1) folded bias.
    masks:  (3, H*W) column-validity masks for kx in {-1, 0, +1}.
    """
    c_in = h.shape[0]
    c_out = w_ref.shape[1]
    HW = H * W
    PAD = d * W + d                                   # largest |flattened shift|
    zpad = jnp.zeros((c_in, PAD), jnp.float32)
    hp = jnp.concatenate([zpad, h, zpad], axis=1)     # (c_in, HW + 2*PAD)

    acc = jnp.zeros((c_out, HW), jnp.float32)
    t = 0
    for ky in (-1, 0, 1):
        for kx in (-1, 0, 1):
            s = ky * d * W + kx * d                   # flattened source offset
            sh = hp[:, PAD + s:PAD + s + HW]          # (c_in, HW), zero where row OOB
            if kx != 0:                               # kill horizontal row-wrap
                sh = sh * masks[kx + 1:kx + 2, :]
            acc = acc + jnp.dot(w_ref[t], sh, preferred_element_type=jnp.float32)
            t += 1
    return jnp.maximum(acc + b_ref[...], 0.0)


def _spatial_attention_kernel(x_ref, masks_ref, w1_ref, b1_ref, w2_ref, b2_ref,
                              w3_ref, b3_ref, w4_ref, b4_ref, o_ref, *, H, W, d):
    xb = x_ref[...].astype(jnp.float32)               # (C, H*W)
    masks = masks_ref[...]                            # (3, H*W)

    # ConvBlock 1: 1x1 conv (C -> m) + folded BN + ReLU
    h = jnp.dot(w1_ref[...], xb, preferred_element_type=jnp.float32)
    h = jnp.maximum(h + b1_ref[...], 0.0)             # (m, H*W)

    # ConvBlocks 2 & 3: 3x3 dilated convs (m -> m) + folded BN + ReLU
    h = _dilated_conv_block(h, w2_ref, b2_ref, masks, H=H, W=W, d=d)
    h = _dilated_conv_block(h, w3_ref, b3_ref, masks, H=H, W=W, d=d)

    # ConvBlock 4: 1x1 conv (m -> 1) + folded BN + ReLU
    y = jnp.dot(w4_ref[...], h, preferred_element_type=jnp.float32)
    o_ref[...] = jnp.maximum(y + b4_ref[...], 0.0).astype(o_ref.dtype)


def spatial_attention(x, params, *, d=4):
    B, C, H, W = x.shape
    HW = H * W
    x3 = x.reshape(B, C, HW)                          # native dtype, contiguous reshape

    # Column-validity masks for horizontal tap offsets kx*d, kx in {-1, 0, +1}:
    # a flattened lane shift by kx*d would otherwise wrap into the adjacent row.
    col = jnp.tile(jnp.arange(W, dtype=jnp.int32), H)                     # (HW,)
    masks = jnp.stack([(col - d >= 0).astype(jnp.float32),
                       jnp.ones((HW,), jnp.float32),
                       (col + d < W).astype(jnp.float32)], axis=0)        # (3, HW)

    in_arrays = (x3, masks,
                 params["w1"], params["b1"], params["w2"], params["b2"],
                 params["w3"], params["b3"], params["w4"], params["b4"])

    def const_spec(a):
        nd = a.ndim
        return pl.BlockSpec(a.shape, lambda b, _nd=nd: (0,) * _nd)

    in_specs = ([pl.BlockSpec((None, C, HW), lambda b: (b, 0, 0))]
                + [const_spec(a) for a in in_arrays[1:]])

    kernel = functools.partial(_spatial_attention_kernel, H=H, W=W, d=d)

    out = pl.pallas_call(
        kernel,
        out_shape=jax.ShapeDtypeStruct((B, 1, HW), jnp.float32),
        grid_spec=pltpu.PrefetchScalarGridSpec(
            num_scalar_prefetch=0,
            grid=(B,),
            in_specs=in_specs,
            out_specs=pl.BlockSpec((None, 1, HW), lambda b: (b, 0, 0)),
        ),
        compiler_params=pltpu.CompilerParams(
            dimension_semantics=("parallel",),
            vmem_limit_bytes=48 * 1024 * 1024,
        ),
    )(*in_arrays)
    return out.reshape(B, 1, H, W)


def fold_params(raw, eps=EPS):
    """Fold eval-mode BatchNorm into the (bias-free) conv weights."""
    def fold(w, bn):
        g, b, mean, var = bn
        s = g * jax.lax.rsqrt(var + eps)
        return w * s[:, None, None, None], b - mean * s

    w1, b1 = fold(raw["w1"], raw["bn1"])     # (m, C, 1, 1), (m,)
    w2, b2 = fold(raw["w2"], raw["bn2"])     # (m, m, 3, 3), (m,)
    w3, b3 = fold(raw["w3"], raw["bn3"])
    w4, b4 = fold(raw["w4"], raw["bn4"])     # (1, m, 1, 1), (1,)

    def taps(w):  # (c_out, c_in, 3, 3) -> (9, c_out, c_in), taps (ky, kx) row-major
        return jnp.transpose(w, (2, 3, 0, 1)).reshape(9, w.shape[0], w.shape[1])

    return {
        "w1": w1[:, :, 0, 0],                # (m, C)
        "b1": b1[:, None],                   # (m, 1)
        "w2": taps(w2), "b2": b2[:, None],
        "w3": taps(w3), "b3": b3[:, None],
        "w4": w4[:, :, 0, 0],                # (1, m)
        "b4": b4[:, None],                   # (1, 1)
    }


def reference(x, raw, *, d=4, eps=EPS):
    def conv_block(y, w, bn, pad, dil):
        y = jax.lax.conv_general_dilated(
            y, w, window_strides=(1, 1),
            padding=[(pad, pad), (pad, pad)],
            rhs_dilation=(dil, dil),
            dimension_numbers=("NCHW", "OIHW", "NCHW"),
            precision=jax.lax.Precision.HIGHEST)
        g, b, mean, var = bn
        s = g * jax.lax.rsqrt(var + eps)
        y = y * s[None, :, None, None] + (b - mean * s)[None, :, None, None]
        return jnp.maximum(y, 0.0)

    y = conv_block(x, raw["w1"], raw["bn1"], 0, 1)
    y = conv_block(y, raw["w2"], raw["bn2"], d, d)
    y = conv_block(y, raw["w3"], raw["bn3"], d, d)
    y = conv_block(y, raw["w4"], raw["bn4"], 0, 1)
    return y


def init_params(key, channels, r=16):
    m = channels // r
    ks = jax.random.split(key, 8)

    def bn_params(k, n):
        k1, k2, k3, k4 = jax.random.split(k, 4)
        return (1.0 + 0.1 * jax.random.normal(k1, (n,), jnp.float32),      # gamma
                0.05 * jax.random.normal(k2, (n,), jnp.float32),           # beta
                0.1 * jax.random.normal(k3, (n,), jnp.float32),            # running mean
                0.5 + jnp.abs(jax.random.normal(k4, (n,), jnp.float32)))   # running var

    return {
        "w1": 0.1 * jax.random.normal(ks[0], (m, channels, 1, 1), jnp.float32),
        "bn1": bn_params(ks[1], m),
        "w2": 0.1 * jax.random.normal(ks[2], (m, m, 3, 3), jnp.float32),
        "bn2": bn_params(ks[3], m),
        "w3": 0.1 * jax.random.normal(ks[4], (m, m, 3, 3), jnp.float32),
        "bn3": bn_params(ks[5], m),
        "w4": 0.1 * jax.random.normal(ks[6], (1, m, 1, 1), jnp.float32),
        "bn4": bn_params(ks[7], 1),
    }


if __name__ == "__main__":
    B, C, H, W = 2, 64, 16, 16
    r, d = 16, 4
    key = jax.random.PRNGKey(0)
    kx, kp = jax.random.split(key)
    x = jax.random.normal(kx, (B, C, H, W), jnp.float32)

    raw = init_params(kp, C, r)
    folded = fold_params(raw)

    out = spatial_attention(x, folded, d=d)
    out = jax.block_until_ready(out)

    ref = reference(x, raw, d=d)
    assert out.shape == (B, 1, H, W)
    assert jnp.allclose(out, ref, atol=1e-4, rtol=1e-4), "mismatch vs reference"
    print("KERNEL_OK")
</pallas_src>

<mosaic_0001>
module attributes {stable_mosaic.version = 11 : i64} {
  func.func @_spatial_attention_kernel(%arg0: i32, %arg1: memref<1x64x256xf32, #tpu.memory_space<vmem>>, %arg2: memref<3x256xf32, #tpu.memory_space<vmem>>, %arg3: memref<4x64xf32, #tpu.memory_space<vmem>>, %arg4: memref<4x1xf32, #tpu.memory_space<vmem>>, %arg5: memref<9x4x4xf32, #tpu.memory_space<vmem>>, %arg6: memref<4x1xf32, #tpu.memory_space<vmem>>, %arg7: memref<9x4x4xf32, #tpu.memory_space<vmem>>, %arg8: memref<4x1xf32, #tpu.memory_space<vmem>>, %arg9: memref<1x4xf32, #tpu.memory_space<vmem>>, %arg10: memref<1x1xf32, #tpu.memory_space<vmem>>, %arg11: memref<1x1x256xf32, #tpu.memory_space<vmem>>) attributes {dimension_semantics = [#tpu.dimension_semantics<parallel>], iteration_bounds = array<i64: 2>, scalar_prefetch = 0 : i64, scratch_operands = 0 : i64, tpu.core_type = #tpu.core_type<tc>, window_params = [{transform_indices = @transform_0, window_bounds = array<i64: 1, 64, 256>}, {pipeline_mode = #tpu.pipeline_mode<synchronous>, transform_indices = @transform_1, window_bounds = array<i64: 3, 256>}, {pipeline_mode = #tpu.pipeline_mode<synchronous>, transform_indices = @transform_2, window_bounds = array<i64: 4, 64>}, {pipeline_mode = #tpu.pipeline_mode<synchronous>, transform_indices = @transform_3, window_bounds = array<i64: 4, 1>}, {pipeline_mode = #tpu.pipeline_mode<synchronous>, transform_indices = @transform_4, window_bounds = array<i64: 9, 4, 4>}, {pipeline_mode = #tpu.pipeline_mode<synchronous>, transform_indices = @transform_5, window_bounds = array<i64: 4, 1>}, {pipeline_mode = #tpu.pipeline_mode<synchronous>, transform_indices = @transform_6, window_bounds = array<i64: 9, 4, 4>}, {pipeline_mode = #tpu.pipeline_mode<synchronous>, transform_indices = @transform_7, window_bounds = array<i64: 4, 1>}, {pipeline_mode = #tpu.pipeline_mode<synchronous>, transform_indices = @transform_8, window_bounds = array<i64: 1, 4>}, {pipeline_mode = #tpu.pipeline_mode<synchronous>, transform_indices = @transform_9, window_bounds = array<i64: 1, 1>}, {transform_indices = @transform_10, window_bounds = array<i64: 1, 1, 256>}]} {
    %c0 = arith.constant 0 : index
    %c0_0 = arith.constant 0 : index
    %c0_1 = arith.constant 0 : index
    %0 = vector.load %arg1[%c0, %c0_0, %c0_1] : memref<1x64x256xf32, #tpu.memory_space<vmem>>, vector<1x64x256xf32>
    %1 = vector.shape_cast %0 : vector<1x64x256xf32> to vector<64x256xf32>
    %c0_2 = arith.constant 0 : index
    %c0_3 = arith.constant 0 : index
    %2 = vector.load %arg2[%c0_2, %c0_3] : memref<3x256xf32, #tpu.memory_space<vmem>>, vector<3x256xf32>
    %c0_4 = arith.constant 0 : index
    %c0_5 = arith.constant 0 : index
    %3 = vector.load %arg3[%c0_4, %c0_5] : memref<4x64xf32, #tpu.memory_space<vmem>>, vector<4x64xf32>
    %cst = arith.constant dense<0.000000e+00> : vector<4x256xf32>
    %4 = tpu.matmul %3, %1, %cst {dimension_numbers = #tpu.dot_dimension_numbers<[1], [0], [0], [1], [0, 0, 1, 1], [], []>} : vector<4x64xf32>, vector<64x256xf32>, vector<4x256xf32> -> vector<4x256xf32>
    %c0_6 = arith.constant 0 : index
    %c0_7 = arith.constant 0 : index
    %5 = vector.load %arg4[%c0_6, %c0_7] : memref<4x1xf32, #tpu.memory_space<vmem>>, vector<4x1xf32>
    %6 = vector.broadcast %5 : vector<4x1xf32> to vector<4x256xf32>
    %7 = arith.addf %4, %6 : vector<4x256xf32>
    %cst_8 = arith.constant 0.000000e+00 : f32
    %8 = vector.broadcast %cst_8 : f32 to vector<4x256xf32>
    %9 = arith.maximumf %7, %8 : vector<4x256xf32>
    %cst_9 = arith.constant 0.000000e+00 : f32
    %10 = vector.broadcast %cst_9 : f32 to vector<4x68xf32>
    %11 = tpu.concatenate %10, %9, %10 in 1 : vector<4x68xf32>, vector<4x256xf32>, vector<4x68xf32> -> vector<4x392xf32>
    %cst_10 = arith.constant 0.000000e+00 : f32
    %12 = vector.broadcast %cst_10 : f32 to vector<4x256xf32>
    %13 = vector.extract_strided_slice %11 {offsets = [0, 0], sizes = [4, 256], strides = [1, 1]} : vector<4x392xf32> to vector<4x256xf32>
    %14 = vector.extract_strided_slice %2 {offsets = [0, 0], sizes = [1, 256], strides = [1, 1]} : vector<3x256xf32> to vector<1x256xf32>
    %15 = vector.broadcast %14 : vector<1x256xf32> to vector<4x256xf32>
    %16 = arith.mulf %13, %15 : vector<4x256xf32>
    %c0_11 = arith.constant 0 : index
    %c0_12 = arith.constant 0 : index
    %c0_13 = arith.constant 0 : index
    %17 = vector.load %arg5[%c0_11, %c0_12, %c0_13] : memref<9x4x4xf32, #tpu.memory_space<vmem>>, vector<1x4x4xf32>
    %18 = vector.shape_cast %17 : vector<1x4x4xf32> to vector<4x4xf32>
    %cst_14 = arith.constant dense<0.000000e+00> : vector<4x256xf32>
    %19 = tpu.matmul %18, %16, %cst_14 {dimension_numbers = #tpu.dot_dimension_numbers<[1], [0], [0], [1], [0, 0, 1, 1], [], []>} : vector<4x4xf32>, vector<4x256xf32>, vector<4x256xf32> -> vector<4x256xf32>
    %20 = arith.addf %12, %19 : vector<4x256xf32>
    %21 = vector.extract_strided_slice %11 {offsets = [0, 4], sizes = [4, 256], strides = [1, 1]} : vector<4x392xf32> to vector<4x256xf32>
    %c1 = arith.constant 1 : index
    %c0_15 = arith.constant 0 : index
    %c0_16 = arith.constant 0 : index
    %22 = vector.load %arg5[%c1, %c0_15, %c0_16] : memref<9x4x4xf32, #tpu.memory_space<vmem>>, vector<1x4x4xf32>
    %23 = vector.shape_cast %22 : vector<1x4x4xf32> to vector<4x4xf32>
    %cst_17 = arith.constant dense<0.000000e+00> : vector<4x256xf32>
    %24 = tpu.matmul %23, %21, %cst_17 {dimension_numbers = #tpu.dot_dimension_numbers<[1], [0], [0], [1], [0, 0, 1, 1], [], []>} : vector<4x4xf32>, vector<4x256xf32>, vector<4x256xf32> -> vector<4x256xf32>
    %25 = arith.addf %20, %24 : vector<4x256xf32>
    %26 = vector.extract_strided_slice %11 {offsets = [0, 8], sizes = [4, 256], strides = [1, 1]} : vector<4x392xf32> to vector<4x256xf32>
    %27 = vector.extract_strided_slice %2 {offsets = [2, 0], sizes = [1, 256], strides = [1, 1]} : vector<3x256xf32> to vector<1x256xf32>
    %28 = vector.broadcast %27 : vector<1x256xf32> to vector<4x256xf32>
    %29 = arith.mulf %26, %28 : vector<4x256xf32>
    %c2 = arith.constant 2 : index
    %c0_18 = arith.constant 0 : index
    %c0_19 = arith.constant 0 : index
    %30 = vector.load %arg5[%c2, %c0_18, %c0_19] : memref<9x4x4xf32, #tpu.memory_space<vmem>>, vector<1x4x4xf32>
    %31 = vector.shape_cast %30 : vector<1x4x4xf32> to vector<4x4xf32>
    %cst_20 = arith.constant dense<0.000000e+00> : vector<4x256xf32>
    %32 = tpu.matmul %31, %29, %cst_20 {dimension_numbers = #tpu.dot_dimension_numbers<[1], [0], [0], [1], [0, 0, 1, 1], [], []>} : vector<4x4xf32>, vector<4x256xf32>, vector<4x256xf32> -> vector<4x256xf32>
    %33 = arith.addf %25, %32 : vector<4x256xf32>
    %34 = vector.extract_strided_slice %11 {offsets = [0, 64], sizes = [4, 256], strides = [1, 1]} : vector<4x392xf32> to vector<4x256xf32>
    %35 = vector.extract_strided_slice %2 {offsets = [0, 0], sizes = [1, 256], strides = [1, 1]} : vector<3x256xf32> to vector<1x256xf32>
    %36 = vector.broadcast %35 : vector<1x256xf32> to vector<4x256xf32>
    %37 = arith.mulf %34, %36 : vector<4x256xf32>
    %c3 = arith.constant 3 : index
    %c0_21 = arith.constant 0 : index
    %c0_22 = arith.constant 0 : index
    %38 = vector.load %arg5[%c3, %c0_21, %c0_22] : memref<9x4x4xf32, #tpu.memory_space<vmem>>, vector<1x4x4xf32>
    %39 = vector.shape_cast %38 : vector<1x4x4xf32> to vector<4x4xf32>
    %cst_23 = arith.constant dense<0.000000e+00> : vector<4x256xf32>
    %40 = tpu.matmul %39, %37, %cst_23 {dimension_numbers = #tpu.dot_dimension_numbers<[1], [0], [0], [1], [0, 0, 1, 1], [], []>} : vector<4x4xf32>, vector<4x256xf32>, vector<4x256xf32> -> vector<4x256xf32>
    %41 = arith.addf %33, %40 : vector<4x256xf32>
    %42 = vector.extract_strided_slice %11 {offsets = [0, 68], sizes = [4, 256], strides = [1, 1]} : vector<4x392xf32> to vector<4x256xf32>
    %c4 = arith.constant 4 : index
    %c0_24 = arith.constant 0 : index
    %c0_25 = arith.constant 0 : index
    %43 = vector.load %arg5[%c4, %c0_24, %c0_25] : memref<9x4x4xf32, #tpu.memory_space<vmem>>, vector<1x4x4xf32>
    %44 = vector.shape_cast %43 : vector<1x4x4xf32> to vector<4x4xf32>
    %cst_26 = arith.constant dense<0.000000e+00> : vector<4x256xf32>
    %45 = tpu.matmul %44, %42, %cst_26 {dimension_numbers = #tpu.dot_dimension_numbers<[1], [0], [0], [1], [0, 0, 1, 1], [], []>} : vector<4x4xf32>, vector<4x256xf32>, vector<4x256xf32> -> vector<4x256xf32>
    %46 = arith.addf %41, %45 : vector<4x256xf32>
    %47 = vector.extract_strided_slice %11 {offsets = [0, 72], sizes = [4, 256], strides = [1, 1]} : vector<4x392xf32> to vector<4x256xf32>
    %48 = vector.extract_strided_slice %2 {offsets = [2, 0], sizes = [1, 256], strides = [1, 1]} : vector<3x256xf32> to vector<1x256xf32>
    %49 = vector.broadcast %48 : vector<1x256xf32> to vector<4x256xf32>
    %50 = arith.mulf %47, %49 : vector<4x256xf32>
    %c5 = arith.constant 5 : index
    %c0_27 = arith.constant 0 : index
    %c0_28 = arith.constant 0 : index
    %51 = vector.load %arg5[%c5, %c0_27, %c0_28] : memref<9x4x4xf32, #tpu.memory_space<vmem>>, vector<1x4x4xf32>
    %52 = vector.shape_cast %51 : vector<1x4x4xf32> to vector<4x4xf32>
    %cst_29 = arith.constant dense<0.000000e+00> : vector<4x256xf32>
    %53 = tpu.matmul %52, %50, %cst_29 {dimension_numbers = #tpu.dot_dimension_numbers<[1], [0], [0], [1], [0, 0, 1, 1], [], []>} : vector<4x4xf32>, vector<4x256xf32>, vector<4x256xf32> -> vector<4x256xf32>
    %54 = arith.addf %46, %53 : vector<4x256xf32>
    %55 = vector.extract_strided_slice %11 {offsets = [0, 128], sizes = [4, 256], strides = [1, 1]} : vector<4x392xf32> to vector<4x256xf32>
    %56 = vector.extract_strided_slice %2 {offsets = [0, 0], sizes = [1, 256], strides = [1, 1]} : vector<3x256xf32> to vector<1x256xf32>
    %57 = vector.broadcast %56 : vector<1x256xf32> to vector<4x256xf32>
    %58 = arith.mulf %55, %57 : vector<4x256xf32>
    %c6 = arith.constant 6 : index
    %c0_30 = arith.constant 0 : index
    %c0_31 = arith.constant 0 : index
    %59 = vector.load %arg5[%c6, %c0_30, %c0_31] : memref<9x4x4xf32, #tpu.memory_space<vmem>>, vector<1x4x4xf32>
    %60 = vector.shape_cast %59 : vector<1x4x4xf32> to vector<4x4xf32>
    %cst_32 = arith.constant dense<0.000000e+00> : vector<4x256xf32>
    %61 = tpu.matmul %60, %58, %cst_32 {dimension_numbers = #tpu.dot_dimension_numbers<[1], [0], [0], [1], [0, 0, 1, 1], [], []>} : vector<4x4xf32>, vector<4x256xf32>, vector<4x256xf32> -> vector<4x256xf32>
    %62 = arith.addf %54, %61 : vector<4x256xf32>
    %63 = vector.extract_strided_slice %11 {offsets = [0, 132], sizes = [4, 256], strides = [1, 1]} : vector<4x392xf32> to vector<4x256xf32>
    %c7 = arith.constant 7 : index
    %c0_33 = arith.constant 0 : index
    %c0_34 = arith.constant 0 : index
    %64 = vector.load %arg5[%c7, %c0_33, %c0_34] : memref<9x4x4xf32, #tpu.memory_space<vmem>>, vector<1x4x4xf32>
    %65 = vector.shape_cast %64 : vector<1x4x4xf32> to vector<4x4xf32>
    %cst_35 = arith.constant dense<0.000000e+00> : vector<4x256xf32>
    %66 = tpu.matmul %65, %63, %cst_35 {dimension_numbers = #tpu.dot_dimension_numbers<[1], [0], [0], [1], [0, 0, 1, 1], [], []>} : vector<4x4xf32>, vector<4x256xf32>, vector<4x256xf32> -> vector<4x256xf32>
    %67 = arith.addf %62, %66 : vector<4x256xf32>
    %68 = vector.extract_strided_slice %11 {offsets = [0, 136], sizes = [4, 256], strides = [1, 1]} : vector<4x392xf32> to vector<4x256xf32>
    %69 = vector.extract_strided_slice %2 {offsets = [2, 0], sizes = [1, 256], strides = [1, 1]} : vector<3x256xf32> to vector<1x256xf32>
    %70 = vector.broadcast %69 : vector<1x256xf32> to vector<4x256xf32>
    %71 = arith.mulf %68, %70 : vector<4x256xf32>
    %c8 = arith.constant 8 : index
    %c0_36 = arith.constant 0 : index
    %c0_37 = arith.constant 0 : index
    %72 = vector.load %arg5[%c8, %c0_36, %c0_37] : memref<9x4x4xf32, #tpu.memory_space<vmem>>, vector<1x4x4xf32>
    %73 = vector.shape_cast %72 : vector<1x4x4xf32> to vector<4x4xf32>
    %cst_38 = arith.constant dense<0.000000e+00> : vector<4x256xf32>
    %74 = tpu.matmul %73, %71, %cst_38 {dimension_numbers = #tpu.dot_dimension_numbers<[1], [0], [0], [1], [0, 0, 1, 1], [], []>} : vector<4x4xf32>, vector<4x256xf32>, vector<4x256xf32> -> vector<4x256xf32>
    %75 = arith.addf %67, %74 : vector<4x256xf32>
    %c0_39 = arith.constant 0 : index
    %c0_40 = arith.constant 0 : index
    %76 = vector.load %arg6[%c0_39, %c0_40] : memref<4x1xf32, #tpu.memory_space<vmem>>, vector<4x1xf32>
    %77 = vector.broadcast %76 : vector<4x1xf32> to vector<4x256xf32>
    %78 = arith.addf %75, %77 : vector<4x256xf32>
    %cst_41 = arith.constant 0.000000e+00 : f32
    %79 = vector.broadcast %cst_41 : f32 to vector<4x256xf32>
    %80 = arith.maximumf %78, %79 : vector<4x256xf32>
    %cst_42 = arith.constant 0.000000e+00 : f32
    %81 = vector.broadcast %cst_42 : f32 to vector<4x68xf32>
    %82 = tpu.concatenate %81, %80, %81 in 1 : vector<4x68xf32>, vector<4x256xf32>, vector<4x68xf32> -> vector<4x392xf32>
    %cst_43 = arith.constant 0.000000e+00 : f32
    %83 = vector.broadcast %cst_43 : f32 to vector<4x256xf32>
    %84 = vector.extract_strided_slice %82 {offsets = [0, 0], sizes = [4, 256], strides = [1, 1]} : vector<4x392xf32> to vector<4x256xf32>
    %85 = vector.extract_strided_slice %2 {offsets = [0, 0], sizes = [1, 256], strides = [1, 1]} : vector<3x256xf32> to vector<1x256xf32>
    %86 = vector.broadcast %85 : vector<1x256xf32> to vector<4x256xf32>
    %87 = arith.mulf %84, %86 : vector<4x256xf32>
    %c0_44 = arith.constant 0 : index
    %c0_45 = arith.constant 0 : index
    %c0_46 = arith.constant 0 : index
    %88 = vector.load %arg7[%c0_44, %c0_45, %c0_46] : memref<9x4x4xf32, #tpu.memory_space<vmem>>, vector<1x4x4xf32>
    %89 = vector.shape_cast %88 : vector<1x4x4xf32> to vector<4x4xf32>
    %cst_47 = arith.constant dense<0.000000e+00> : vector<4x256xf32>
    %90 = tpu.matmul %89, %87, %cst_47 {dimension_numbers = #tpu.dot_dimension_numbers<[1], [0], [0], [1], [0, 0, 1, 1], [], []>} : vector<4x4xf32>, vector<4x256xf32>, vector<4x256xf32> -> vector<4x256xf32>
    %91 = arith.addf %83, %90 : vector<4x256xf32>
    %92 = vector.extract_strided_slice %82 {offsets = [0, 4], sizes = [4, 256], strides = [1, 1]} : vector<4x392xf32> to vector<4x256xf32>
    %c1_48 = arith.constant 1 : index
    %c0_49 = arith.constant 0 : index
    %c0_50 = arith.constant 0 : index
    %93 = vector.load %arg7[%c1_48, %c0_49, %c0_50] : memref<9x4x4xf32, #tpu.memory_space<vmem>>, vector<1x4x4xf32>
    %94 = vector.shape_cast %93 : vector<1x4x4xf32> to vector<4x4xf32>
    %cst_51 = arith.constant dense<0.000000e+00> : vector<4x256xf32>
    %95 = tpu.matmul %94, %92, %cst_51 {dimension_numbers = #tpu.dot_dimension_numbers<[1], [0], [0], [1], [0, 0, 1, 1], [], []>} : vector<4x4xf32>, vector<4x256xf32>, vector<4x256xf32> -> vector<4x256xf32>
    %96 = arith.addf %91, %95 : vector<4x256xf32>
    %97 = vector.extract_strided_slice %82 {offsets = [0, 8], sizes = [4, 256], strides = [1, 1]} : vector<4x392xf32> to vector<4x256xf32>
    %98 = vector.extract_strided_slice %2 {offsets = [2, 0], sizes = [1, 256], strides = [1, 1]} : vector<3x256xf32> to vector<1x256xf32>
    %99 = vector.broadcast %98 : vector<1x256xf32> to vector<4x256xf32>
    %100 = arith.mulf %97, %99 : vector<4x256xf32>
    %c2_52 = arith.constant 2 : index
    %c0_53 = arith.constant 0 : index
    %c0_54 = arith.constant 0 : index
    %101 = vector.load %arg7[%c2_52, %c0_53, %c0_54] : memref<9x4x4xf32, #tpu.memory_space<vmem>>, vector<1x4x4xf32>
    %102 = vector.shape_cast %101 : vector<1x4x4xf32> to vector<4x4xf32>
    %cst_55 = arith.constant dense<0.000000e+00> : vector<4x256xf32>
    %103 = tpu.matmul %102, %100, %cst_55 {dimension_numbers = #tpu.dot_dimension_numbers<[1], [0], [0], [1], [0, 0, 1, 1], [], []>} : vector<4x4xf32>, vector<4x256xf32>, vector<4x256xf32> -> vector<4x256xf32>
    %104 = arith.addf %96, %103 : vector<4x256xf32>
    %105 = vector.extract_strided_slice %82 {offsets = [0, 64], sizes = [4, 256], strides = [1, 1]} : vector<4x392xf32> to vector<4x256xf32>
    %106 = vector.extract_strided_slice %2 {offsets = [0, 0], sizes = [1, 256], strides = [1, 1]} : vector<3x256xf32> to vector<1x256xf32>
    %107 = vector.broadcast %106 : vector<1x256xf32> to vector<4x256xf32>
    %108 = arith.mulf %105, %107 : vector<4x256xf32>
    %c3_56 = arith.constant 3 : index
    %c0_57 = arith.constant 0 : index
    %c0_58 = arith.constant 0 : index
    %109 = vector.load %arg7[%c3_56, %c0_57, %c0_58] : memref<9x4x4xf32, #tpu.memory_space<vmem>>, vector<1x4x4xf32>
    %110 = vector.shape_cast %109 : vector<1x4x4xf32> to vector<4x4xf32>
    %cst_59 = arith.constant dense<0.000000e+00> : vector<4x256xf32>
    %111 = tpu.matmul %110, %108, %cst_59 {dimension_numbers = #tpu.dot_dimension_numbers<[1], [0], [0], [1], [0, 0, 1, 1], [], []>} : vector<4x4xf32>, vector<4x256xf32>, vector<4x256xf32> -> vector<4x256xf32>
    %112 = arith.addf %104, %111 : vector<4x256xf32>
    %113 = vector.extract_strided_slice %82 {offsets = [0, 68], sizes = [4, 256], strides = [1, 1]} : vector<4x392xf32> to vector<4x256xf32>
    %c4_60 = arith.constant 4 : index
    %c0_61 = arith.constant 0 : index
    %c0_62 = arith.constant 0 : index
    %114 = vector.load %arg7[%c4_60, %c0_61, %c0_62] : memref<9x4x4xf32, #tpu.memory_space<vmem>>, vector<1x4x4xf32>
    %115 = vector.shape_cast %114 : vector<1x4x4xf32> to vector<4x4xf32>
    %cst_63 = arith.constant dense<0.000000e+00> : vector<4x256xf32>
    %116 = tpu.matmul %115, %113, %cst_63 {dimension_numbers = #tpu.dot_dimension_numbers<[1], [0], [0], [1], [0, 0, 1, 1], [], []>} : vector<4x4xf32>, vector<4x256xf32>, vector<4x256xf32> -> vector<4x256xf32>
    %117 = arith.addf %112, %116 : vector<4x256xf32>
    %118 = vector.extract_strided_slice %82 {offsets = [0, 72], sizes = [4, 256], strides = [1, 1]} : vector<4x392xf32> to vector<4x256xf32>
    %119 = vector.extract_strided_slice %2 {offsets = [2, 0], sizes = [1, 256], strides = [1, 1]} : vector<3x256xf32> to vector<1x256xf32>
    %120 = vector.broadcast %119 : vector<1x256xf32> to vector<4x256xf32>
    %121 = arith.mulf %118, %120 : vector<4x256xf32>
    %c5_64 = arith.constant 5 : index
    %c0_65 = arith.constant 0 : index
    %c0_66 = arith.constant 0 : index
    %122 = vector.load %arg7[%c5_64, %c0_65, %c0_66] : memref<9x4x4xf32, #tpu.memory_space<vmem>>, vector<1x4x4xf32>
    %123 = vector.shape_cast %122 : vector<1x4x4xf32> to vector<4x4xf32>
    %cst_67 = arith.constant dense<0.000000e+00> : vector<4x256xf32>
    %124 = tpu.matmul %123, %121, %cst_67 {dimension_numbers = #tpu.dot_dimension_numbers<[1], [0], [0], [1], [0, 0, 1, 1], [], []>} : vector<4x4xf32>, vector<4x256xf32>, vector<4x256xf32> -> vector<4x256xf32>
    %125 = arith.addf %117, %124 : vector<4x256xf32>
    %126 = vector.extract_strided_slice %82 {offsets = [0, 128], sizes = [4, 256], strides = [1, 1]} : vector<4x392xf32> to vector<4x256xf32>
    %127 = vector.extract_strided_slice %2 {offsets = [0, 0], sizes = [1, 256], strides = [1, 1]} : vector<3x256xf32> to vector<1x256xf32>
    %128 = vector.broadcast %127 : vector<1x256xf32> to vector<4x256xf32>
    %129 = arith.mulf %126, %128 : vector<4x256xf32>
    %c6_68 = arith.constant 6 : index
    %c0_69 = arith.constant 0 : index
    %c0_70 = arith.constant 0 : index
    %130 = vector.load %arg7[%c6_68, %c0_69, %c0_70] : memref<9x4x4xf32, #tpu.memory_space<vmem>>, vector<1x4x4xf32>
    %131 = vector.shape_cast %130 : vector<1x4x4xf32> to vector<4x4xf32>
    %cst_71 = arith.constant dense<0.000000e+00> : vector<4x256xf32>
    %132 = tpu.matmul %131, %129, %cst_71 {dimension_numbers = #tpu.dot_dimension_numbers<[1], [0], [0], [1], [0, 0, 1, 1], [], []>} : vector<4x4xf32>, vector<4x256xf32>, vector<4x256xf32> -> vector<4x256xf32>
    %133 = arith.addf %125, %132 : vector<4x256xf32>
    %134 = vector.extract_strided_slice %82 {offsets = [0, 132], sizes = [4, 256], strides = [1, 1]} : vector<4x392xf32> to vector<4x256xf32>
    %c7_72 = arith.constant 7 : index
    %c0_73 = arith.constant 0 : index
    %c0_74 = arith.constant 0 : index
    %135 = vector.load %arg7[%c7_72, %c0_73, %c0_74] : memref<9x4x4xf32, #tpu.memory_space<vmem>>, vector<1x4x4xf32>
    %136 = vector.shape_cast %135 : vector<1x4x4xf32> to vector<4x4xf32>
    %cst_75 = arith.constant dense<0.000000e+00> : vector<4x256xf32>
    %137 = tpu.matmul %136, %134, %cst_75 {dimension_numbers = #tpu.dot_dimension_numbers<[1], [0], [0], [1], [0, 0, 1, 1], [], []>} : vector<4x4xf32>, vector<4x256xf32>, vector<4x256xf32> -> vector<4x256xf32>
    %138 = arith.addf %133, %137 : vector<4x256xf32>
    %139 = vector.extract_strided_slice %82 {offsets = [0, 136], sizes = [4, 256], strides = [1, 1]} : vector<4x392xf32> to vector<4x256xf32>
    %140 = vector.extract_strided_slice %2 {offsets = [2, 0], sizes = [1, 256], strides = [1, 1]} : vector<3x256xf32> to vector<1x256xf32>
    %141 = vector.broadcast %140 : vector<1x256xf32> to vector<4x256xf32>
    %142 = arith.mulf %139, %141 : vector<4x256xf32>
    %c8_76 = arith.constant 8 : index
    %c0_77 = arith.constant 0 : index
    %c0_78 = arith.constant 0 : index
    %143 = vector.load %arg7[%c8_76, %c0_77, %c0_78] : memref<9x4x4xf32, #tpu.memory_space<vmem>>, vector<1x4x4xf32>
    %144 = vector.shape_cast %143 : vector<1x4x4xf32> to vector<4x4xf32>
    %cst_79 = arith.constant dense<0.000000e+00> : vector<4x256xf32>
    %145 = tpu.matmul %144, %142, %cst_79 {dimension_numbers = #tpu.dot_dimension_numbers<[1], [0], [0], [1], [0, 0, 1, 1], [], []>} : vector<4x4xf32>, vector<4x256xf32>, vector<4x256xf32> -> vector<4x256xf32>
    %146 = arith.addf %138, %145 : vector<4x256xf32>
    %c0_80 = arith.constant 0 : index
    %c0_81 = arith.constant 0 : index
    %147 = vector.load %arg8[%c0_80, %c0_81] : memref<4x1xf32, #tpu.memory_space<vmem>>, vector<4x1xf32>
    %148 = vector.broadcast %147 : vector<4x1xf32> to vector<4x256xf32>
    %149 = arith.addf %146, %148 : vector<4x256xf32>
    %cst_82 = arith.constant 0.000000e+00 : f32
    %150 = vector.broadcast %cst_82 : f32 to vector<4x256xf32>
    %151 = arith.maximumf %149, %150 : vector<4x256xf32>
    %c0_83 = arith.constant 0 : index
    %c0_84 = arith.constant 0 : index
    %152 = vector.load %arg9[%c0_83, %c0_84] : memref<1x4xf32, #tpu.memory_space<vmem>>, vector<1x4xf32>
    %cst_85 = arith.constant dense<0.000000e+00> : vector<1x256xf32>
    %153 = tpu.matmul %152, %151, %cst_85 {dimension_numbers = #tpu.dot_dimension_numbers<[1], [0], [0], [1], [0, 0, 1, 1], [], []>} : vector<1x4xf32>, vector<4x256xf32>, vector<1x256xf32> -> vector<1x256xf32>
    %c0_86 = arith.constant 0 : index
    %c0_87 = arith.constant 0 : index
    %154 = vector.load %arg10[%c0_86, %c0_87] : memref<1x1xf32, #tpu.memory_space<vmem>>, vector<1x1xf32>
    %155 = vector.broadcast %154 : vector<1x1xf32> to vector<1x256xf32>
    %156 = arith.addf %153, %155 : vector<1x256xf32>
    %cst_88 = arith.constant 0.000000e+00 : f32
    %157 = vector.broadcast %cst_88 : f32 to vector<1x256xf32>
    %158 = arith.maximumf %156, %157 : vector<1x256xf32>
    %c0_89 = arith.constant 0 : index
    %c0_90 = arith.constant 0 : index
    %c0_91 = arith.constant 0 : index
    %159 = vector.load %arg11[%c0_89, %c0_90, %c0_91] : memref<1x1x256xf32, #tpu.memory_space<vmem>>, vector<1x1x256xf32>
    %160 = vector.shape_cast %159 : vector<1x1x256xf32> to vector<1x256xf32>
    %161 = vector.shape_cast %158 : vector<1x256xf32> to vector<1x1x256xf32>
    tpu.vector_store %arg11[%c0_89, %c0_90, %c0_91], %161 {strides = array<i32>} : memref<1x1x256xf32, #tpu.memory_space<vmem>>, vector<1x1x256xf32>,
    return
  }
  func.func @transform_0(%arg0: i32) -> (i32, i32, i32) {
    %c0_i32 = arith.constant 0 : i32
    %c0_i32_0 = arith.constant 0 : i32
    %c0_i32_1 = arith.constant 0 : i32
    return %arg0, %c0_i32, %c0_i32_0 : i32, i32, i32
  }
  func.func @transform_1(%arg0: i32) -> (i32, i32) {
    %c0_i32 = arith.constant 0 : i32
    %c0_i32_0 = arith.constant 0 : i32
    %c0_i32_1 = arith.constant 0 : i32
    return %c0_i32, %c0_i32_0 : i32, i32
  }
  func.func @transform_2(%arg0: i32) -> (i32, i32) {
    %c0_i32 = arith.constant 0 : i32
    %c0_i32_0 = arith.constant 0 : i32
    %c0_i32_1 = arith.constant 0 : i32
    return %c0_i32, %c0_i32_0 : i32, i32
  }
  func.func @transform_3(%arg0: i32) -> (i32, i32) {
    %c0_i32 = arith.constant 0 : i32
    %c0_i32_0 = arith.constant 0 : i32
    %c0_i32_1 = arith.constant 0 : i32
    return %c0_i32, %c0_i32_0 : i32, i32
  }
  func.func @transform_4(%arg0: i32) -> (i32, i32, i32) {
    %c0_i32 = arith.constant 0 : i32
    %c0_i32_0 = arith.constant 0 : i32
    %c0_i32_1 = arith.constant 0 : i32
    %c0_i32_2 = arith.constant 0 : i32
    return %c0_i32, %c0_i32_0, %c0_i32_1 : i32, i32, i32
  }
  func.func @transform_5(%arg0: i32) -> (i32, i32) {
    %c0_i32 = arith.constant 0 : i32
    %c0_i32_0 = arith.constant 0 : i32
    %c0_i32_1 = arith.constant 0 : i32
    return %c0_i32, %c0_i32_0 : i32, i32
  }
  func.func @transform_6(%arg0: i32) -> (i32, i32, i32) {
    %c0_i32 = arith.constant 0 : i32
    %c0_i32_0 = arith.constant 0 : i32
    %c0_i32_1 = arith.constant 0 : i32
    %c0_i32_2 = arith.constant 0 : i32
    return %c0_i32, %c0_i32_0, %c0_i32_1 : i32, i32, i32
  }
  func.func @transform_7(%arg0: i32) -> (i32, i32) {
    %c0_i32 = arith.constant 0 : i32
    %c0_i32_0 = arith.constant 0 : i32
    %c0_i32_1 = arith.constant 0 : i32
    return %c0_i32, %c0_i32_0 : i32, i32
  }
  func.func @transform_8(%arg0: i32) -> (i32, i32) {
    %c0_i32 = arith.constant 0 : i32
    %c0_i32_0 = arith.constant 0 : i32
    %c0_i32_1 = arith.constant 0 : i32
    return %c0_i32, %c0_i32_0 : i32, i32
  }
  func.func @transform_9(%arg0: i32) -> (i32, i32) {
    %c0_i32 = arith.constant 0 : i32
    %c0_i32_0 = arith.constant 0 : i32
    %c0_i32_1 = arith.constant 0 : i32
    return %c0_i32, %c0_i32_0 : i32, i32
  }
  func.func @transform_10(%arg0: i32) -> (i32, i32, i32) {
    %c0_i32 = arith.constant 0 : i32
    %c0_i32_0 = arith.constant 0 : i32
    %c0_i32_1 = arith.constant 0 : i32
    return %arg0, %c0_i32, %c0_i32_0 : i32, i32, i32
  }
}

</mosaic_0001>

<llo_original>
// kernel: tpu_custom_call.1
$region0: #{tpu_custom_call.1}
  #allocation0 [shape = 'u32[]', space=smem, size = 0x4, offset = 0x4, fixed_abs, tag = 'smem constant byte address 0x4 - core index']
  #allocation1 [shape = 'u32[72,128]{1,0:T(1,128)}', space=vmem, size = 0x9000, scoped, tag = 'internal scratch']
  #allocation2 [shape = 'f32[1,1]{1,0:T(1,128)S(1)}', space=vmem, size = 0x200, scoped, tag = 'scoped memory for tpu_custom_call.1']
  %s0 = inlined_call_operand.hbm [shape: f32[2,64,256], index: 0, kind: input, shape index: {}]
  %s1 = inlined_call_operand.vmem [shape: f32[3,256], index: 1, kind: input, shape index: {}]
  %s2 = inlined_call_operand.vmem [shape: f32[4,64], index: 2, kind: input, shape index: {}]
  %s3 = inlined_call_operand.vmem [shape: f32[4,1], index: 3, kind: input, shape index: {}]
  %s4 = inlined_call_operand.vmem [shape: f32[9,4,4], index: 4, kind: input, shape index: {}]
  %s5 = inlined_call_operand.vmem [shape: f32[4,1], index: 5, kind: input, shape index: {}]
  %s6 = inlined_call_operand.vmem [shape: f32[9,4,4], index: 6, kind: input, shape index: {}]
  %s7 = inlined_call_operand.vmem [shape: f32[4,1], index: 7, kind: input, shape index: {}]
  %s8 = inlined_call_operand.vmem [shape: f32[1,4], index: 8, kind: input, shape index: {}]
  %s9 = inlined_call_operand.<no memory space> [shape: f32[1,1], index: 9, kind: input, shape index: {}]
  %s10 = inlined_call_operand.hbm [shape: f32[2,1,256], index: 10, kind: output, shape index: {}]
  %s11 = sld [smem:[#allocation0]]
  $region77: #{tpu_custom_call.1} parent=0
    _
  %s13 = ssub.s32 1, %s11
  %s14 = scalar_select 0, %s13, %s11
  %v15 = vstv %s9
  %16 = vst [vmem:[#allocation2] sm:$0x1] %v15
  $region1: #{tpu_custom_call.1} parent=0
    #allocation3 [shape = 'u8[131072]{0}', space=vmem, size = 0x20000, scoped, tag = 'input window, operand 0']
    #allocation4 [shape = 's32[2]{0}', space=sflag, size = 0x8, scoped, tag = 'scoped memory for tpu_custom_call.1']
    #allocation5 [shape = 's32[2]{0}', space=sflag, size = 0x8, scoped, tag = 'scoped memory for tpu_custom_call.1']
    #allocation6 [shape = 'u8[2048]{0}', space=vmem, size = 0x800, scoped, tag = 'output window, operand 0']
    %17 = vsyncpa [#allocation4], 0
    %s18 = scalar_lea.sflag [#allocation4], 1
    %19 = vsyncpa %s18, 0
    %20 = vsyncpa [#allocation5], 0
    %s21 = scalar_lea.sflag [#allocation5], 1
    %22 = vsyncpa %s21, 0
    loop: start=0, step=1, limit=4
    $region2: #{tpu_custom_call.1} parent=1 // loop_pre_header
      _
    $region3: #{tpu_custom_call.1} parent=1 // loop_header
      %s24 = sphi 0, %s28
      %p25 = scmp.ge.s32.totalorder %s24, 4
      %s34 = sphi 0, %s36
      %s37 = sphi 0, %s34
      %s38 = sphi 0, %s37
      %s54 = sphi 0, %s38
      %s58 = sphi 0, %s58
      %s60 = sphi 0, %s58
      %s61 = sphi 0, %s60
      %s75 = sphi 0, %s61
      %s79 = sphi 0, %s79
      %s81 = sphi 0, %s79
      %s82 = sphi 0, %s81
      %s96 = sphi 0, %s82
      %s100 = sphi 0, %s100
      %s102 = sphi 0, %s100
      %s103 = sphi 0, %s102
      %s117 = sphi 0, %s103
      %s121 = sphi 0, %s121
      %s123 = sphi 0, %s121
      %s124 = sphi 0, %s123
      %s138 = sphi 0, %s124
      %s142 = sphi 0, %s142
      %s144 = sphi 0, %s142
      %s145 = sphi 0, %s144
      %s159 = sphi 0, %s145
      %s163 = sphi 0, %s163
      %s165 = sphi 0, %s163
      %s166 = sphi 0, %s165
      %s180 = sphi 0, %s166
      %s184 = sphi 0, %s184
      %s186 = sphi 0, %s184
      %s187 = sphi 0, %s186
      %s201 = sphi 0, %s187
      %s205 = sphi 0, %s205
      %s207 = sphi 0, %s205
      %s208 = sphi 0, %s207
      %s222 = sphi 0, %s208
      %s226 = sphi 0, %s226
      %s228 = sphi 0, %s226
      %s229 = sphi 0, %s228
      %s243 = sphi 0, %s229
      %s249 = sphi 0, %s251
      %s252 = sphi 0, %s249
      %s253 = sphi 0, %s252
      %s269 = sphi 0, %s253
    $region4: #{tpu_custom_call.1} parent=1 // loop_header_branch
      %27 = sbr.rel (%p25) target = $region8
    $region5: #{tpu_custom_call.1} parent=1 // loop_body
      %s29 = ssub.s32 %s24, 1
      %s30 = ssub.s32 %s24, 2
      %s31 = sadd.s32 %s24, 1
      %s32 = ssub.s32 %s24, %s31
      %p33 = scmp.eq.s32.totalorder %s32, 0
      %s35 = sadd.s32 %s34, 1
      %s36 = scalar_select %p33, %s34, %s35
      %p39 = pneg %p33
      %p40 = scmp.eq.s32.totalorder %s24, 1
      %p41 = por %p39, %p40
      %p42 = scmp.ne.s32.totalorder %s34, %s37
      %p43 = scmp.eq.s32.totalorder %s24, 0
      %p44 = por %p42, %p43
      %p45 = scmp.ne.s32.totalorder %s34, %s37
      %p46 = scmp.eq.s32.totalorder %s29, 1
      %p47 = por %p45, %p46
      %p48 = scmp.ne.s32.totalorder %s37, %s38
      %p49 = scmp.eq.s32.totalorder %s29, 0
      %p50 = por %p48, %p49
      %p51 = scmp.ne.s32.totalorder %s37, %s38
      %p52 = scmp.eq.s32.totalorder %s30, 1
      %p53 = por %p51, %p52
      %p55 = scmp.ne.s32.totalorder %s38, %s54
      %p56 = scmp.eq.s32.totalorder %s30, 0
      %p57 = por %p55, %p56
      %s59 = sadd.s32 %s58, 1
      %p62 = scmp.eq.s32.totalorder %s24, 1
      %p63 = scmp.ne.s32.totalorder %s58, %s60
      %p64 = scmp.eq.s32.totalorder %s24, 0
      %p65 = por %p63, %p64
      %p66 = scmp.ne.s32.totalorder %s58, %s60
      %p67 = scmp.eq.s32.totalorder %s29, 1
      %p68 = por %p66, %p67
      %p69 = scmp.ne.s32.totalorder %s60, %s61
      %p70 = scmp.eq.s32.totalorder %s29, 0
      %p71 = por %p69, %p70
      %p72 = scmp.ne.s32.totalorder %s60, %s61
      %p73 = scmp.eq.s32.totalorder %s30, 1
      %p74 = por %p72, %p73
      %p76 = scmp.ne.s32.totalorder %s61, %s75
      %p77 = scmp.eq.s32.totalorder %s30, 0
      %p78 = por %p76, %p77
      %s80 = sadd.s32 %s79, 1
      %p83 = scmp.eq.s32.totalorder %s24, 1
      %p84 = scmp.ne.s32.totalorder %s79, %s81
      %p85 = scmp.eq.s32.totalorder %s24, 0
      %p86 = por %p84, %p85
      %p87 = scmp.ne.s32.totalorder %s79, %s81
      %p88 = scmp.eq.s32.totalorder %s29, 1
      %p89 = por %p87, %p88
      %p90 = scmp.ne.s32.totalorder %s81, %s82
      %p91 = scmp.eq.s32.totalorder %s29, 0
      %p92 = por %p90, %p91
      %p93 = scmp.ne.s32.totalorder %s81, %s82
      %p94 = scmp.eq.s32.totalorder %s30, 1
      %p95 = por %p93, %p94
      %p97 = scmp.ne.s32.totalorder %s82, %s96
      %p98 = scmp.eq.s32.totalorder %s30, 0
      %p99 = por %p97, %p98
      %s101 = sadd.s32 %s100, 1
      %p104 = scmp.eq.s32.totalorder %s24, 1
      %p105 = scmp.ne.s32.totalorder %s100, %s102
      %p106 = scmp.eq.s32.totalorder %s24, 0
      %p107 = por %p105, %p106
      %p108 = scmp.ne.s32.totalorder %s100, %s102
      %p109 = scmp.eq.s32.totalorder %s29, 1
      %p110 = por %p108, %p109
      %p111 = scmp.ne.s32.totalorder %s102, %s103
      %p112 = scmp.eq.s32.totalorder %s29, 0
      %p113 = por %p111, %p112
      %p114 = scmp.ne.s32.totalorder %s102, %s103
      %p115 = scmp.eq.s32.totalorder %s30, 1
      %p116 = por %p114, %p115
      %p118 = scmp.ne.s32.totalorder %s103, %s117
      %p119 = scmp.eq.s32.totalorder %s30, 0
      %p120 = por %p118, %p119
      %s122 = sadd.s32 %s121, 1
      %p125 = scmp.eq.s32.totalorder %s24, 1
      %p126 = scmp.ne.s32.totalorder %s121, %s123
      %p127 = scmp.eq.s32.totalorder %s24, 0
      %p128 = por %p126, %p127
      %p129 = scmp.ne.s32.totalorder %s121, %s123
      %p130 = scmp.eq.s32.totalorder %s29, 1
      %p131 = por %p129, %p130
      %p132 = scmp.ne.s32.totalorder %s123, %s124
      %p133 = scmp.eq.s32.totalorder %s29, 0
      %p134 = por %p132, %p133
      %p135 = scmp.ne.s32.totalorder %s123, %s124
      %p136 = scmp.eq.s32.totalorder %s30, 1
      %p137 = por %p135, %p136
      %p139 = scmp.ne.s32.totalorder %s124, %s138
      %p140 = scmp.eq.s32.totalorder %s30, 0
      %p141 = por %p139, %p140
      %s143 = sadd.s32 %s142, 1
      %p146 = scmp.eq.s32.totalorder %s24, 1
      %p147 = scmp.ne.s32.totalorder %s142, %s144
      %p148 = scmp.eq.s32.totalorder %s24, 0
      %p149 = por %p147, %p148
      %p150 = scmp.ne.s32.totalorder %s142, %s144
      %p151 = scmp.eq.s32.totalorder %s29, 1
      %p152 = por %p150, %p151
      %p153 = scmp.ne.s32.totalorder %s144, %s145
      %p154 = scmp.eq.s32.totalorder %s29, 0
      %p155 = por %p153, %p154
      %p156 = scmp.ne.s32.totalorder %s144, %s145
      %p157 = scmp.eq.s32.totalorder %s30, 1
      %p158 = por %p156, %p157
      %p160 = scmp.ne.s32.totalorder %s145, %s159
      %p161 = scmp.eq.s32.totalorder %s30, 0
      %p162 = por %p160, %p161
      %s164 = sadd.s32 %s163, 1
      %p167 = scmp.eq.s32.totalorder %s24, 1
      %p168 = scmp.ne.s32.totalorder %s163, %s165
      %p169 = scmp.eq.s32.totalorder %s24, 0
      %p170 = por %p168, %p169
      %p171 = scmp.ne.s32.totalorder %s163, %s165
      %p172 = scmp.eq.s32.totalorder %s29, 1
      %p173 = por %p171, %p172
      %p174 = scmp.ne.s32.totalorder %s165, %s166
      %p175 = scmp.eq.s32.totalorder %s29, 0
      %p176 = por %p174, %p175
      %p177 = scmp.ne.s32.totalorder %s165, %s166
      %p178 = scmp.eq.s32.totalorder %s30, 1
      %p179 = por %p177, %p178
      %p181 = scmp.ne.s32.totalorder %s166, %s180
      %p182 = scmp.eq.s32.totalorder %s30, 0
      %p183 = por %p181, %p182
      %s185 = sadd.s32 %s184, 1
      %p188 = scmp.eq.s32.totalorder %s24, 1
      %p189 = scmp.ne.s32.totalorder %s184, %s186
      %p190 = scmp.eq.s32.totalorder %s24, 0
      %p191 = por %p189, %p190
      %p192 = scmp.ne.s32.totalorder %s184, %s186
      %p193 = scmp.eq.s32.totalorder %s29, 1
      %p194 = por %p192, %p193
      %p195 = scmp.ne.s32.totalorder %s186, %s187
      %p196 = scmp.eq.s32.totalorder %s29, 0
      %p197 = por %p195, %p196
      %p198 = scmp.ne.s32.totalorder %s186, %s187
      %p199 = scmp.eq.s32.totalorder %s30, 1
      %p200 = por %p198, %p199
      %p202 = scmp.ne.s32.totalorder %s187, %s201
      %p203 = scmp.eq.s32.totalorder %s30, 0
      %p204 = por %p202, %p203
      %s206 = sadd.s32 %s205, 1
      %p209 = scmp.eq.s32.totalorder %s24, 1
      %p210 = scmp.ne.s32.totalorder %s205, %s207
      %p211 = scmp.eq.s32.totalorder %s24, 0
      %p212 = por %p210, %p211
      %p213 = scmp.ne.s32.totalorder %s205, %s207
      %p214 = scmp.eq.s32.totalorder %s29, 1
      %p215 = por %p213, %p214
      %p216 = scmp.ne.s32.totalorder %s207, %s208
      %p217 = scmp.eq.s32.totalorder %s29, 0
      %p218 = por %p216, %p217
      %p219 = scmp.ne.s32.totalorder %s207, %s208
      %p220 = scmp.eq.s32.totalorder %s30, 1
      %p221 = por %p219, %p220
      %p223 = scmp.ne.s32.totalorder %s208, %s222
      %p224 = scmp.eq.s32.totalorder %s30, 0
      %p225 = por %p223, %p224
      %s227 = sadd.s32 %s226, 1
      %p230 = scmp.eq.s32.totalorder %s24, 1
      %p231 = scmp.ne.s32.totalorder %s226, %s228
      %p232 = scmp.eq.s32.totalorder %s24, 0
      %p233 = por %p231, %p232
      %p234 = scmp.ne.s32.totalorder %s226, %s228
      %p235 = scmp.eq.s32.totalorder %s29, 1
      %p236 = por %p234, %p235
      %p237 = scmp.ne.s32.totalorder %s228, %s229
      %p238 = scmp.eq.s32.totalorder %s29, 0
      %p239 = por %p237, %p238
      %p240 = scmp.ne.s32.totalorder %s228, %s229
      %p241 = scmp.eq.s32.totalorder %s30, 1
      %p242 = por %p240, %p241
      %p244 = scmp.ne.s32.totalorder %s229, %s243
      %p245 = scmp.eq.s32.totalorder %s30, 0
      %p246 = por %p244, %p245
      %s247 = ssub.s32 %s24, %s31
      %p248 = scmp.eq.s32.totalorder %s247, 0
      %s250 = sadd.s32 %s249, 1
      %s251 = scalar_select %p248, %s249, %s250
      %p254 = pneg %p248
      %p255 = scmp.eq.s32.totalorder %s24, 1
      %p256 = por %p254, %p255
      %p257 = scmp.ne.s32.totalorder %s249, %s252
      %p258 = scmp.eq.s32.totalorder %s24, 0
      %p259 = por %p257, %p258
      %p260 = scmp.ne.s32.totalorder %s249, %s252
      %p261 = scmp.eq.s32.totalorder %s29, 1
      %p262 = por %p260, %p261
      %p263 = scmp.ne.s32.totalorder %s252, %s253
      %p264 = scmp.eq.s32.totalorder %s29, 0
      %p265 = por %p263, %p264
      %p266 = scmp.ne.s32.totalorder %s252, %s253
      %p267 = scmp.eq.s32.totalorder %s30, 1
      %p268 = por %p266, %p267
      %p270 = scmp.ne.s32.totalorder %s253, %s269
      %p271 = scmp.eq.s32.totalorder %s30, 0
      %p272 = por %p270, %p271
      %p273 = scmp.le.s32.totalorder 1, %s24
      %p274 = scmp.lt.s32.totalorder %s24, 3
      %p275 = pnand %p273, %p274
      %p276 = pneg %p275
      // Predicated region
      $region9: #{tpu_custom_call.1} parent=5 // pred_check
        _
      $region10: #{tpu_custom_call.1} parent=5 // pred_check_branch
        %278 = sbr.rel (%p275) target = $region12
      $region11: #{tpu_custom_call.1} parent=5 // pred_region
        %s279 = ssub.s32 %s24, 1
        // Predicated region
        $region13: #{tpu_custom_call.1} parent=11 // pred_check
          %p280 = pneg %p71
        $region14: #{tpu_custom_call.1} parent=11 // pred_check_branch
          %282 = sbr.rel (%p280) target = $region16
        $region15: #{tpu_custom_call.1} parent=11 // pred_region
          _
        $region16: #{tpu_custom_call.1} parent=11 // pred_fallthru
          _
        // Predicated region
        $region17: #{tpu_custom_call.1} parent=11 // pred_check
          %p283 = pneg %p92
        $region18: #{tpu_custom_call.1} parent=11 // pred_check_branch
          %285 = sbr.rel (%p283) target = $region20
        $region19: #{tpu_custom_call.1} parent=11 // pred_region
          _
        $region20: #{tpu_custom_call.1} parent=11 // pred_fallthru
          _
        // Predicated region
        $region21: #{tpu_custom_call.1} parent=11 // pred_check
          %p286 = pneg %p113
        $region22: #{tpu_custom_call.1} parent=11 // pred_check_branch
          %288 = sbr.rel (%p286) target = $region24
        $region23: #{tpu_custom_call.1} parent=11 // pred_region
          _
        $region24: #{tpu_custom_call.1} parent=11 // pred_fallthru
          _
        // Predicated region
        $region25: #{tpu_custom_call.1} parent=11 // pred_check
          %p289 = pneg %p134
        $region26: #{tpu_custom_call.1} parent=11 // pred_check_branch
          %291 = sbr.rel (%p289) target = $region28
        $region27: #{tpu_custom_call.1} parent=11 // pred_region
          _
        $region28: #{tpu_custom_call.1} parent=11 // pred_fallthru
          _
        // Predicated region
        $region29: #{tpu_custom_call.1} parent=11 // pred_check
          %p292 = pneg %p155
        $region30: #{tpu_custom_call.1} parent=11 // pred_check_branch
          %294 = sbr.rel (%p292) target = $region32
        $region31: #{tpu_custom_call.1} parent=11 // pred_region
          _
        $region32: #{tpu_custom_call.1} parent=11 // pred_fallthru
          _
        // Predicated region
        $region33: #{tpu_custom_call.1} parent=11 // pred_check
          %p295 = pneg %p176
        $region34: #{tpu_custom_call.1} parent=11 // pred_check_branch
          %297 = sbr.rel (%p295) target = $region36
        $region35: #{tpu_custom_call.1} parent=11 // pred_region
          _
        $region36: #{tpu_custom_call.1} parent=11 // pred_fallthru
          _
        // Predicated region
        $region37: #{tpu_custom_call.1} parent=11 // pred_check
          %p298 = pneg %p197
        $region38: #{tpu_custom_call.1} parent=11 // pred_check_branch
          %300 = sbr.rel (%p298) target = $region40
        $region39: #{tpu_custom_call.1} parent=11 // pred_region
          _
        $region40: #{tpu_custom_call.1} parent=11 // pred_fallthru
          _
        // Predicated region
        $region41: #{tpu_custom_call.1} parent=11 // pred_check
          %p301 = pneg %p218
        $region42: #{tpu_custom_call.1} parent=11 // pred_check_branch
          %303 = sbr.rel (%p301) target = $region44
        $region43: #{tpu_custom_call.1} parent=11 // pred_region
          _
        $region44: #{tpu_custom_call.1} parent=11 // pred_fallthru
          _
        // Predicated region
        $region45: #{tpu_custom_call.1} parent=11 // pred_check
          %p304 = pneg %p239
        $region46: #{tpu_custom_call.1} parent=11 // pred_check_branch
          %306 = sbr.rel (%p304) target = $region48
        $region47: #{tpu_custom_call.1} parent=11 // pred_region
          _
        $region48: #{tpu_custom_call.1} parent=11 // pred_fallthru
          _
      $region12: #{tpu_custom_call.1} parent=5 // pred_fallthru
        _
      %p307 = scmp.lt.s32.totalorder %s24, 2
      // Predicated region
      $region49: #{tpu_custom_call.1} parent=5 // pred_check
        %p308 = pneg %p307
      $region50: #{tpu_custom_call.1} parent=5 // pred_check_branch
        %310 = sbr.rel (%p308) target = $region52
      $region51: #{tpu_custom_call.1} parent=5 // pred_region
        // Predicated region
        $region53: #{tpu_custom_call.1} parent=51 // pred_check
          %p311 = pneg %p44
        $region54: #{tpu_custom_call.1} parent=51 // pred_check_branch
          %313 = sbr.rel (%p311) target = $region56
        $region55: #{tpu_custom_call.1} parent=51 // pred_region
          %s314 = sand.u32 %s34, 1
          %s315 = scalar_lea.sflag [#allocation4], %s314
          %s316 = sand.u32 %s34, 1
          %s317 = smul.addr %s316, 128
          %s318 = scalar_lea.vmem [#allocation3], %s317
          %320 = vsyncadd %s315, 0
          %s321 = smul.addr %s24, 16
          %s322 = smul.addr %s321, 8
          %s323 = scalar_lea.hbm %s0, %s322
          %s324 = sshll.u32 %s323, 4
          %s325 = int_to_ptr.hbm [resolvable:$true] %s324
          %s326 = sshll.u32 %s318, 4
          %s327 = int_to_ptr.vmem [resolvable:$true] %s326
          %332 = dma.hbm_to_vmem [thread:$0]  %s325, 2048, %s327, %s315, 256, 256, 16
        $region56: #{tpu_custom_call.1} parent=51 // pred_fallthru
          _
      $region52: #{tpu_custom_call.1} parent=5 // pred_fallthru
        _
      %p333 = scmp.le.s32.totalorder 1, %s24
      %p334 = scmp.lt.s32.totalorder %s24, 3
      %p335 = pnand %p333, %p334
      %p336 = pneg %p335
      // Predicated region
      $region57: #{tpu_custom_call.1} parent=5 // pred_check
        _
      $region58: #{tpu_custom_call.1} parent=5 // pred_check_branch
        %338 = sbr.rel (%p335) target = $region60
      $region59: #{tpu_custom_call.1} parent=5 // pred_region
        %s339 = ssub.s32 %s24, 1
        %s340 = sand.u32 %s37, 1
        %s341 = scalar_lea.sflag [#allocation4], %s340
        %s342 = sand.u32 %s37, 1
        %s343 = smul.addr %s342, 128
        %s344 = scalar_lea.vmem [#allocation3], %s343
        // Predicated region
        $region61: #{tpu_custom_call.1} parent=59 // pred_check
          %p345 = pneg %p50
        $region62: #{tpu_custom_call.1} parent=59 // pred_check_branch
          %347 = sbr.rel (%p345) target = $region64
        $region63: #{tpu_custom_call.1} parent=59 // pred_region
          %349 = dma.done %s341, 2048
        $region64: #{tpu_custom_call.1} parent=59 // pred_fallthru
          _
        %s350 = sand.u32 %s37, 1
        %s351 = scalar_lea.sflag [#allocation4], %s350
        %s352 = sand.u32 %s37, 1
        %s353 = smul.addr %s352, 128
        %s354 = scalar_lea.vmem [#allocation3], %s353
        %p355 = pneg %p50
        %p356 = pneg %p47
        %p357 = pneg %p71
        %p358 = pneg %p68
        %p359 = pneg %p92
        %p360 = pneg %p89
        %p361 = pneg %p113
        %p362 = pneg %p110
        %p363 = pneg %p134
        %p364 = pneg %p131
        %p365 = pneg %p155
        %p366 = pneg %p152
        %p367 = pneg %p176
        %p368 = pneg %p173
        %p369 = pneg %p197
        %p370 = pneg %p194
        %p371 = pneg %p218
        %p372 = pneg %p215
        %p373 = pneg %p239
        %p374 = pneg %p236
        %p375 = pneg %p265
        %p376 = pneg %p262
        %s377 = sand.u32 %s252, 1
        %s378 = scalar_lea.sflag [#allocation5], %s377
        %s379 = sand.u32 %s252, 1
        %s380 = smul.addr %s379, 2
        %s381 = scalar_lea.vmem [#allocation6], %s380
        %v382 = vld [vmem:[%s344] sm:$0xff]
        %v383 = vld [vmem:[%s344 + $0x8] sm:$0xff]
        %v384 = vld [vmem:[%s344 + $0x10] sm:$0xff]
        %v385 = vld [vmem:[%s344 + $0x18] sm:$0xff]
        %v386 = vld [vmem:[%s344 + $0x20] sm:$0xff]
        %v387 = vld [vmem:[%s344 + $0x28] sm:$0xff]
        %v388 = vld [vmem:[%s344 + $0x30] sm:$0xff]
        %v389 = vld [vmem:[%s344 + $0x38] sm:$0xff]
        %v390 = vld [vmem:[%s344 + $0x40] sm:$0xff]
        %v391 = vld [vmem:[%s344 + $0x48] sm:$0xff]
        %v392 = vld [vmem:[%s344 + $0x50] sm:$0xff]
        %v393 = vld [vmem:[%s344 + $0x58] sm:$0xff]
        %v394 = vld [vmem:[%s344 + $0x60] sm:$0xff]
        %v395 = vld [vmem:[%s344 + $0x68] sm:$0xff]
        %v396 = vld [vmem:[%s344 + $0x70] sm:$0xff]
        %v397 = vld [vmem:[%s344 + $0x78] sm:$0xff]
        %v398 = vld [vmem:[%s1] sm:$0x77]
        %v399 = vld [vmem:[%s2] sm:$0xf]
        %v400 = vld [vmem:[%s3] sm:$0xf]
        %402 = vset.pattern.permute.xlu0 0
        %403 = vperm.xlu0 %402, %v400
        %v404 = vpop.permute.xlu0 %403
        %vm406 = vcmask 523264
        %v408 = vsel %vm406, %v399, 0
        %410 = vmatpush.msra.mxu0 0.0
        %411 = vmatpush.msra.mxu0 0.0
        %412 = vmatpush.msra.mxu0 0.0
        %413 = vmatpush.msra.mxu0 0.0
        %414 = vmatpush.msra.mxu0 0.0
        %415 = vmatpush.msra.mxu0 0.0
        %416 = vmatpush.msra.mxu0 0.0
        %417 = vmatpush.msra.mxu0 0.0
        %418 = vmatpush.msra.mxu0 %v396
        %419 = vmatpush.msra.mxu0 %v394
        %420 = vmatpush.msra.mxu0 %v392
        %421 = vmatpush.msra.mxu0 %v390
        %422 = vmatpush.msra.mxu0 %v388
        %423 = vmatpush.msra.mxu0 %v386
        %424 = vmatpush.msra.mxu0 %v384
        %425 = vmatpush.msra.mxu0 %v382
        %426 = vmatmul.f32.gmra.mxu0 %v408
        %v427 = vpop.f32.mrf.mxu0
        %v428 = vadd.f32 %v404, %v427
        %429 = vdwg.mxu0
        %430 = vmatpush.msra.mxu0 0.0
        %431 = vmatpush.msra.mxu0 0.0
        %432 = vmatpush.msra.mxu0 0.0
        %433 = vmatpush.msra.mxu0 0.0
        %434 = vmatpush.msra.mxu0 0.0
        %435 = vmatpush.msra.mxu0 0.0
        %436 = vmatpush.msra.mxu0 0.0
        %437 = vmatpush.msra.mxu0 0.0
        %438 = vmatpush.msra.mxu0 %v397
        %439 = vmatpush.msra.mxu0 %v395
        %440 = vmatpush.msra.mxu0 %v393
        %441 = vmatpush.msra.mxu0 %v391
        %442 = vmatpush.msra.mxu0 %v389
        %443 = vmatpush.msra.mxu0 %v387
        %444 = vmatpush.msra.mxu0 %v385
        %445 = vmatpush.msra.mxu0 %v383
        %446 = vmatmul.f32.gmra.mxu0 %v408
        %v447 = vpop.f32.mrf.mxu0
        %v448 = vadd.f32 %v404, %v447
        %449 = vdwg.mxu0
        %v450 = vmax.f32 %v428, 0.0
        %v451 = vmax.f32 %v448, 0.0
        %454 = vrot.lane.b32.xlu0 %v450, 68
        %v455 = vpop.permute.xlu0 %454
        %456 = vrot.lane.b32.xlu0 %v451, 68
        %v457 = vpop.permute.xlu0 %456
        %vm458 = vcmask 556032
        %v459 = vsel %vm458, %v455, %v457
        %v463 = vsel %vm458, 0.0, %v455
        %v464 = vsel %vm458, %v457, 0.0
        %v466 = vperm.slane %v398, 0
        %v467 = vperm.slane %v398, 4
        %v470 = vperm.slane %v466, 0
        %v471 = vperm.slane %v467, 0
        %v472 = vmul.f32 %v463, %v470
        %v473 = vmul.f32 %v459, %v471
        %v474 = vld [vmem:[%s4] sm:$0xf]
        %s475 = scalar_lea.vmem %s4, 4
        %v476 = vld [vmem:[%s475] sm:$0xf]
        %479 = vrot.lane.b32.xlu0 %v463, 124
        %v480 = vpop.permute.xlu0 %479
        %481 = vrot.lane.b32.xlu0 %v459, 124
        %v482 = vpop.permute.xlu0 %481
        %483 = vrot.lane.b32.xlu0 %v464, 124
        %v484 = vpop.permute.xlu0 %483
        %vm485 = vcmask 1014784
        %v486 = vsel %vm485, %v480, %v482
        %v487 = vsel %vm485, %v482, %v484
        %vm488 = vcmask 31744
        %v490 = vsel %vm488, %v476, 0
        %vm492 = vcmask 1043456
        %v493 = vsel %vm492, %v486, 0
        %v495 = vsel %vm492, %v487, 0
        %497 = vmatpush.msra.mxu0 0.0
        %498 = vmatpush.msra.mxu0 0.0
        %499 = vmatpush.msra.mxu0 0.0
        %500 = vmatpush.msra.mxu0 0.0
        %501 = vmatpush.msra.mxu0 0.0
        %502 = vmatpush.msra.mxu0 0.0
        %503 = vmatpush.msra.mxu0 0.0
        %504 = vmatpush.msra.mxu0 0.0
        %505 = vmatpush.msra.mxu0 0.0
        %506 = vmatpush.msra.mxu0 0.0
        %507 = vmatpush.msra.mxu0 0.0
        %508 = vmatpush.msra.mxu0 0.0
        %509 = vmatpush.msra.mxu0 0.0
        %510 = vmatpush.msra.mxu0 0.0
        %511 = vmatpush.msra.mxu0 0.0
        %512 = vmatpush.msra.mxu0 %v493
        %513 = vmatmul.f32.gmra.mxu0 %v490
        %v514 = vpop.f32.mrf.mxu0
        %v515 = vadd.f32 0.0, %v514
        %516 = vdwg.mxu0
        %517 = vmatpush.msra.mxu0 0.0
        %518 = vmatpush.msra.mxu0 0.0
        %519 = vmatpush.msra.mxu0 0.0
        %520 = vmatpush.msra.mxu0 0.0
        %521 = vmatpush.msra.mxu0 0.0
        %522 = vmatpush.msra.mxu0 0.0
        %523 = vmatpush.msra.mxu0 0.0
        %524 = vmatpush.msra.mxu0 0.0
        %525 = vmatpush.msra.mxu0 0.0
        %526 = vmatpush.msra.mxu0 0.0
        %527 = vmatpush.msra.mxu0 0.0
        %528 = vmatpush.msra.mxu0 0.0
        %529 = vmatpush.msra.mxu0 0.0
        %530 = vmatpush.msra.mxu0 0.0
        %531 = vmatpush.msra.mxu0 0.0
        %532 = vmatpush.msra.mxu0 %v495
        %533 = vmatmul.f32.gmra.mxu0 %v490
        %v534 = vpop.f32.mrf.mxu0
        %v535 = vadd.f32 0.0, %v534
        %536 = vdwg.mxu0
        %v538 = vsel %vm488, %v474, 0
        %v541 = vsel %vm492, %v472, 0
        %v544 = vsel %vm492, %v473, 0
        %546 = vmatpush.msra.mxu0 0.0
        %547 = vmatpush.msra.mxu0 0.0
        %548 = vmatpush.msra.mxu0 0.0
        %549 = vmatpush.msra.mxu0 0.0
        %550 = vmatpush.msra.mxu0 0.0
        %551 = vmatpush.msra.mxu0 0.0
        %552 = vmatpush.msra.mxu0 0.0
        %553 = vmatpush.msra.mxu0 0.0
        %554 = vmatpush.msra.mxu0 0.0
        %555 = vmatpush.msra.mxu0 0.0
        %556 = vmatpush.msra.mxu0 0.0
        %557 = vmatpush.msra.mxu0 0.0
        %558 = vmatpush.msra.mxu0 0.0
        %559 = vmatpush.msra.mxu0 0.0
        %560 = vmatpush.msra.mxu0 0.0
        %561 = vmatpush.msra.mxu0 %v541
        %562 = vmatmul.f32.gmra.mxu0 %v538
        %v563 = vpop.f32.mrf.mxu0
        %v564 = vadd.f32 %v515, %v563
        %565 = vdwg.mxu0
        %566 = vmatpush.msra.mxu0 0.0
        %567 = vmatpush.msra.mxu0 0.0
        %568 = vmatpush.msra.mxu0 0.0
        %569 = vmatpush.msra.mxu0 0.0
        %570 = vmatpush.msra.mxu0 0.0
        %571 = vmatpush.msra.mxu0 0.0
        %572 = vmatpush.msra.mxu0 0.0
        %573 = vmatpush.msra.mxu0 0.0
        %574 = vmatpush.msra.mxu0 0.0
        %575 = vmatpush.msra.mxu0 0.0
        %576 = vmatpush.msra.mxu0 0.0
        %577 = vmatpush.msra.mxu0 0.0
        %578 = vmatpush.msra.mxu0 0.0
        %579 = vmatpush.msra.mxu0 0.0
        %580 = vmatpush.msra.mxu0 0.0
        %581 = vmatpush.msra.mxu0 %v544
        %582 = vmatmul.f32.gmra.mxu0 %v538
        %v583 = vpop.f32.mrf.mxu0
        %v584 = vadd.f32 %v535, %v583
        %585 = vdwg.mxu0
        %v586 = vperm.slane %v398, 2
        %v587 = vperm.slane %v398, 6
        %v590 = vperm.slane %v586, 2
        %v591 = vperm.slane %v587, 2
        %594 = vrot.lane.b32.xlu0 %v590, 8
        %v595 = vpop.permute.xlu0 %594
        %596 = vrot.lane.b32.xlu0 %v591, 8
        %v597 = vpop.permute.xlu0 %596
        %vm598 = vcmask 64512
        %v599 = vsel %vm598, %v595, %v597
        %v603 = vmul.f32 %v463, %v595
        %v604 = vmul.f32 %v459, %v599
        %v605 = vmul.f32 %v464, %v597
        %s606 = scalar_lea.vmem %s4, 8
        %v607 = vld [vmem:[%s606] sm:$0xf]
        %611 = vrot.lane.b32.xlu0 %v603, 120
        %v612 = vpop.permute.xlu0 %611
        %613 = vrot.lane.b32.xlu0 %v604, 120
        %v614 = vpop.permute.xlu0 %613
        %615 = vrot.lane.b32.xlu0 %v605, 120
        %v616 = vpop.permute.xlu0 %615
        %vm617 = vcmask 982016
        %v618 = vsel %vm617, %v612, %v614
        %v619 = vsel %vm617, %v614, %v616
        %v621 = vsel %vm488, %v607, 0
        %v623 = vsel %vm492, %v618, 0
        %v625 = vsel %vm492, %v619, 0
        %627 = vmatpush.msra.mxu0 0.0
        %628 = vmatpush.msra.mxu0 0.0
        %629 = vmatpush.msra.mxu0 0.0
        %630 = vmatpush.msra.mxu0 0.0
        %631 = vmatpush.msra.mxu0 0.0
        %632 = vmatpush.msra.mxu0 0.0
        %633 = vmatpush.msra.mxu0 0.0
        %634 = vmatpush.msra.mxu0 0.0
        %635 = vmatpush.msra.mxu0 0.0
        %636 = vmatpush.msra.mxu0 0.0
        %637 = vmatpush.msra.mxu0 0.0
        %638 = vmatpush.msra.mxu0 0.0
        %639 = vmatpush.msra.mxu0 0.0
        %640 = vmatpush.msra.mxu0 0.0
        %641 = vmatpush.msra.mxu0 0.0
        %642 = vmatpush.msra.mxu0 %v623
        %643 = vmatmul.f32.gmra.mxu0 %v621
        %v644 = vpop.f32.mrf.mxu0
        %v645 = vadd.f32 0.0, %v644
        %646 = vdwg.mxu0
        %647 = vmatpush.msra.mxu0 0.0
        %648 = vmatpush.msra.mxu0 0.0
        %649 = vmatpush.msra.mxu0 0.0
        %650 = vmatpush.msra.mxu0 0.0
        %651 = vmatpush.msra.mxu0 0.0
        %652 = vmatpush.msra.mxu0 0.0
        %653 = vmatpush.msra.mxu0 0.0
        %654 = vmatpush.msra.mxu0 0.0
        %655 = vmatpush.msra.mxu0 0.0
        %656 = vmatpush.msra.mxu0 0.0
        %657 = vmatpush.msra.mxu0 0.0
        %658 = vmatpush.msra.mxu0 0.0
        %659 = vmatpush.msra.mxu0 0.0
        %660 = vmatpush.msra.mxu0 0.0
        %661 = vmatpush.msra.mxu0 0.0
        %662 = vmatpush.msra.mxu0 %v625
        %663 = vmatmul.f32.gmra.mxu0 %v621
        %v664 = vpop.f32.mrf.mxu0
        %v665 = vadd.f32 0.0, %v664
        %666 = vdwg.mxu0
        %v667 = vadd.f32 %v564, %v645
        %v668 = vadd.f32 %v584, %v665
        %671 = vrot.lane.b32.xlu0 %v470, 64
        %v672 = vpop.permute.xlu0 %671
        %673 = vrot.lane.b32.xlu0 %v471, 64
        %v674 = vpop.permute.xlu0 %673
        %v675 = vsel %vm406, %v672, %v674
        %v679 = vmul.f32 %v463, %v672
        %v680 = vmul.f32 %v459, %v675
        %v681 = vmul.f32 %v464, %v674
        %s682 = scalar_lea.vmem %s4, 12
        %v683 = vld [vmem:[%s682] sm:$0xf]
        %687 = vrot.lane.b32.xlu0 %v679, 64
        %v688 = vpop.permute.xlu0 %687
        %689 = vrot.lane.b32.xlu0 %v680, 64
        %v690 = vpop.permute.xlu0 %689
        %691 = vrot.lane.b32.xlu0 %v681, 64
        %v692 = vpop.permute.xlu0 %691
        %v693 = vsel %vm406, %v688, %v690
        %v694 = vsel %vm406, %v690, %v692
        %v696 = vsel %vm488, %v683, 0
        %v698 = vsel %vm492, %v693, 0
        %v700 = vsel %vm492, %v694, 0
        %702 = vmatpush.msra.mxu0 0.0
        %703 = vmatpush.msra.mxu0 0.0
        %704 = vmatpush.msra.mxu0 0.0
        %705 = vmatpush.msra.mxu0 0.0
        %706 = vmatpush.msra.mxu0 0.0
        %707 = vmatpush.msra.mxu0 0.0
        %708 = vmatpush.msra.mxu0 0.0
        %709 = vmatpush.msra.mxu0 0.0
        %710 = vmatpush.msra.mxu0 0.0
        %711 = vmatpush.msra.mxu0 0.0
        %712 = vmatpush.msra.mxu0 0.0
        %713 = vmatpush.msra.mxu0 0.0
        %714 = vmatpush.msra.mxu0 0.0
        %715 = vmatpush.msra.mxu0 0.0
        %716 = vmatpush.msra.mxu0 0.0
        %717 = vmatpush.msra.mxu0 %v698
        %718 = vmatmul.f32.gmra.mxu0 %v696
        %v719 = vpop.f32.mrf.mxu0
        %v720 = vadd.f32 0.0, %v719
        %721 = vdwg.mxu0
        %722 = vmatpush.msra.mxu0 0.0
        %723 = vmatpush.msra.mxu0 0.0
        %724 = vmatpush.msra.mxu0 0.0
        %725 = vmatpush.msra.mxu0 0.0
        %726 = vmatpush.msra.mxu0 0.0
        %727 = vmatpush.msra.mxu0 0.0
        %728 = vmatpush.msra.mxu0 0.0
        %729 = vmatpush.msra.mxu0 0.0
        %730 = vmatpush.msra.mxu0 0.0
        %731 = vmatpush.msra.mxu0 0.0
        %732 = vmatpush.msra.mxu0 0.0
        %733 = vmatpush.msra.mxu0 0.0
        %734 = vmatpush.msra.mxu0 0.0
        %735 = vmatpush.msra.mxu0 0.0
        %736 = vmatpush.msra.mxu0 0.0
        %737 = vmatpush.msra.mxu0 %v700
        %738 = vmatmul.f32.gmra.mxu0 %v696
        %v739 = vpop.f32.mrf.mxu0
        %v740 = vadd.f32 0.0, %v739
        %741 = vdwg.mxu0
        %v742 = vadd.f32 %v667, %v720
        %v743 = vadd.f32 %v668, %v740
        %s744 = scalar_lea.vmem %s4, 16
        %v745 = vld [vmem:[%s744] sm:$0xf]
        %746 = vrot.lane.b32.xlu0 %v463, 60
        %v747 = vpop.permute.xlu0 %746
        %748 = vrot.lane.b32.xlu0 %v459, 60
        %v749 = vpop.permute.xlu0 %748
        %750 = vrot.lane.b32.xlu0 %v464, 60
        %v751 = vpop.permute.xlu0 %750
        %vm752 = vcmask 490496
        %v753 = vsel %vm752, %v747, %v749
        %v754 = vsel %vm752, %v749, %v751
        %v756 = vsel %vm488, %v745, 0
        %v758 = vsel %vm492, %v753, 0
        %v760 = vsel %vm492, %v754, 0
        %762 = vmatpush.msra.mxu0 0.0
        %763 = vmatpush.msra.mxu0 0.0
        %764 = vmatpush.msra.mxu0 0.0
        %765 = vmatpush.msra.mxu0 0.0
        %766 = vmatpush.msra.mxu0 0.0
        %767 = vmatpush.msra.mxu0 0.0
        %768 = vmatpush.msra.mxu0 0.0
        %769 = vmatpush.msra.mxu0 0.0
        %770 = vmatpush.msra.mxu0 0.0
        %771 = vmatpush.msra.mxu0 0.0
        %772 = vmatpush.msra.mxu0 0.0
        %773 = vmatpush.msra.mxu0 0.0
        %774 = vmatpush.msra.mxu0 0.0
        %775 = vmatpush.msra.mxu0 0.0
        %776 = vmatpush.msra.mxu0 0.0
        %777 = vmatpush.msra.mxu0 %v758
        %778 = vmatmul.f32.gmra.mxu0 %v756
        %v779 = vpop.f32.mrf.mxu0
        %v780 = vadd.f32 0.0, %v779
        %781 = vdwg.mxu0
        %782 = vmatpush.msra.mxu0 0.0
        %783 = vmatpush.msra.mxu0 0.0
        %784 = vmatpush.msra.mxu0 0.0
        %785 = vmatpush.msra.mxu0 0.0
        %786 = vmatpush.msra.mxu0 0.0
        %787 = vmatpush.msra.mxu0 0.0
        %788 = vmatpush.msra.mxu0 0.0
        %789 = vmatpush.msra.mxu0 0.0
        %790 = vmatpush.msra.mxu0 0.0
        %791 = vmatpush.msra.mxu0 0.0
        %792 = vmatpush.msra.mxu0 0.0
        %793 = vmatpush.msra.mxu0 0.0
        %794 = vmatpush.msra.mxu0 0.0
        %795 = vmatpush.msra.mxu0 0.0
        %796 = vmatpush.msra.mxu0 0.0
        %797 = vmatpush.msra.mxu0 %v760
        %798 = vmatmul.f32.gmra.mxu0 %v756
        %v799 = vpop.f32.mrf.mxu0
        %v800 = vadd.f32 0.0, %v799
        %801 = vdwg.mxu0
        %v802 = vadd.f32 %v742, %v780
        %v803 = vadd.f32 %v743, %v800
        %804 = vrot.lane.b32.xlu0 %v590, 72
        %v805 = vpop.permute.xlu0 %804
        %806 = vrot.lane.b32.xlu0 %v591, 72
        %v807 = vpop.permute.xlu0 %806
        %vm808 = vcmask 588800
        %v809 = vsel %vm808, %v805, %v807
        %v813 = vmul.f32 %v463, %v805
        %v814 = vmul.f32 %v459, %v809
        %v815 = vmul.f32 %v464, %v807
        %s816 = scalar_lea.vmem %s4, 20
        %v817 = vld [vmem:[%s816] sm:$0xf]
        %821 = vrot.lane.b32.xlu0 %v813, 56
        %v822 = vpop.permute.xlu0 %821
        %823 = vrot.lane.b32.xlu0 %v814, 56
        %v824 = vpop.permute.xlu0 %823
        %825 = vrot.lane.b32.xlu0 %v815, 56
        %v826 = vpop.permute.xlu0 %825
        %vm827 = vcmask 457728
        %v828 = vsel %vm827, %v822, %v824
        %v829 = vsel %vm827, %v824, %v826
        %v831 = vsel %vm488, %v817, 0
        %v833 = vsel %vm492, %v828, 0
        %v835 = vsel %vm492, %v829, 0
        %837 = vmatpush.msra.mxu0 0.0
        %838 = vmatpush.msra.mxu0 0.0
        %839 = vmatpush.msra.mxu0 0.0
        %840 = vmatpush.msra.mxu0 0.0
        %841 = vmatpush.msra.mxu0 0.0
        %842 = vmatpush.msra.mxu0 0.0
        %843 = vmatpush.msra.mxu0 0.0
        %844 = vmatpush.msra.mxu0 0.0
        %845 = vmatpush.msra.mxu0 0.0
        %846 = vmatpush.msra.mxu0 0.0
        %847 = vmatpush.msra.mxu0 0.0
        %848 = vmatpush.msra.mxu0 0.0
        %849 = vmatpush.msra.mxu0 0.0
        %850 = vmatpush.msra.mxu0 0.0
        %851 = vmatpush.msra.mxu0 0.0
        %852 = vmatpush.msra.mxu0 %v833
        %853 = vmatmul.f32.gmra.mxu0 %v831
        %v854 = vpop.f32.mrf.mxu0
        %v855 = vadd.f32 0.0, %v854
        %856 = vdwg.mxu0
        %857 = vmatpush.msra.mxu0 0.0
        %858 = vmatpush.msra.mxu0 0.0
        %859 = vmatpush.msra.mxu0 0.0
        %860 = vmatpush.msra.mxu0 0.0
        %861 = vmatpush.msra.mxu0 0.0
        %862 = vmatpush.msra.mxu0 0.0
        %863 = vmatpush.msra.mxu0 0.0
        %864 = vmatpush.msra.mxu0 0.0
        %865 = vmatpush.msra.mxu0 0.0
        %866 = vmatpush.msra.mxu0 0.0
        %867 = vmatpush.msra.mxu0 0.0
        %868 = vmatpush.msra.mxu0 0.0
        %869 = vmatpush.msra.mxu0 0.0
        %870 = vmatpush.msra.mxu0 0.0
        %871 = vmatpush.msra.mxu0 0.0
        %872 = vmatpush.msra.mxu0 %v835
        %873 = vmatmul.f32.gmra.mxu0 %v831
        %v874 = vpop.f32.mrf.mxu0
        %v875 = vadd.f32 0.0, %v874
        %876 = vdwg.mxu0
        %v877 = vadd.f32 %v802, %v855
        %v878 = vadd.f32 %v803, %v875
        %v879 = vmul.f32 %v459, %v470
        %v880 = vmul.f32 %v464, %v471
        %s881 = scalar_lea.vmem %s4, 24
        %v882 = vld [vmem:[%s881] sm:$0xf]
        %v884 = vsel %vm488, %v882, 0
        %v887 = vsel %vm492, %v879, 0
        %v890 = vsel %vm492, %v880, 0
        %892 = vmatpush.msra.mxu0 0.0
        %893 = vmatpush.msra.mxu0 0.0
        %894 = vmatpush.msra.mxu0 0.0
        %895 = vmatpush.msra.mxu0 0.0
        %896 = vmatpush.msra.mxu0 0.0
        %897 = vmatpush.msra.mxu0 0.0
        %898 = vmatpush.msra.mxu0 0.0
        %899 = vmatpush.msra.mxu0 0.0
        %900 = vmatpush.msra.mxu0 0.0
        %901 = vmatpush.msra.mxu0 0.0
        %902 = vmatpush.msra.mxu0 0.0
        %903 = vmatpush.msra.mxu0 0.0
        %904 = vmatpush.msra.mxu0 0.0
        %905 = vmatpush.msra.mxu0 0.0
        %906 = vmatpush.msra.mxu0 0.0
        %907 = vmatpush.msra.mxu0 %v887
        %908 = vmatmul.f32.gmra.mxu0 %v884
        %v909 = vpop.f32.mrf.mxu0
        %v910 = vadd.f32 0.0, %v909
        %911 = vdwg.mxu0
        %912 = vmatpush.msra.mxu0 0.0
        %913 = vmatpush.msra.mxu0 0.0
        %914 = vmatpush.msra.mxu0 0.0
        %915 = vmatpush.msra.mxu0 0.0
        %916 = vmatpush.msra.mxu0 0.0
        %917 = vmatpush.msra.mxu0 0.0
        %918 = vmatpush.msra.mxu0 0.0
        %919 = vmatpush.msra.mxu0 0.0
        %920 = vmatpush.msra.mxu0 0.0
        %921 = vmatpush.msra.mxu0 0.0
        %922 = vmatpush.msra.mxu0 0.0
        %923 = vmatpush.msra.mxu0 0.0
        %924 = vmatpush.msra.mxu0 0.0
        %925 = vmatpush.msra.mxu0 0.0
        %926 = vmatpush.msra.mxu0 0.0
        %927 = vmatpush.msra.mxu0 %v890
        %928 = vmatmul.f32.gmra.mxu0 %v884
        %v929 = vpop.f32.mrf.mxu0
        %v930 = vadd.f32 0.0, %v929
        %931 = vdwg.mxu0
        %v932 = vadd.f32 %v877, %v910
        %v933 = vadd.f32 %v878, %v930
        %s934 = scalar_lea.vmem %s4, 28
        %v935 = vld [vmem:[%s934] sm:$0xf]
        %937 = vrot.lane.b32.xlu0 0.0, 124
        %v938 = vpop.permute.xlu0 %937
        %v939 = vsel %vm485, %v484, %v938
        %v941 = vsel %vm488, %v935, 0
        %v943 = vsel %vm492, %v939, 0
        %945 = vmatpush.msra.mxu0 0.0
        %946 = vmatpush.msra.mxu0 0.0
        %947 = vmatpush.msra.mxu0 0.0
        %948 = vmatpush.msra.mxu0 0.0
        %949 = vmatpush.msra.mxu0 0.0
        %950 = vmatpush.msra.mxu0 0.0
        %951 = vmatpush.msra.mxu0 0.0
        %952 = vmatpush.msra.mxu0 0.0
        %953 = vmatpush.msra.mxu0 0.0
        %954 = vmatpush.msra.mxu0 0.0
        %955 = vmatpush.msra.mxu0 0.0
        %956 = vmatpush.msra.mxu0 0.0
        %957 = vmatpush.msra.mxu0 0.0
        %958 = vmatpush.msra.mxu0 0.0
        %959 = vmatpush.msra.mxu0 0.0
        %960 = vmatpush.msra.mxu0 %v495
        %961 = vmatmul.f32.gmra.mxu0 %v941
        %v962 = vpop.f32.mrf.mxu0
        %v963 = vadd.f32 0.0, %v962
        %964 = vdwg.mxu0
        %965 = vmatpush.msra.mxu0 0.0
        %966 = vmatpush.msra.mxu0 0.0
        %967 = vmatpush.msra.mxu0 0.0
        %968 = vmatpush.msra.mxu0 0.0
        %969 = vmatpush.msra.mxu0 0.0
        %970 = vmatpush.msra.mxu0 0.0
        %971 = vmatpush.msra.mxu0 0.0
        %972 = vmatpush.msra.mxu0 0.0
        %973 = vmatpush.msra.mxu0 0.0
        %974 = vmatpush.msra.mxu0 0.0
        %975 = vmatpush.msra.mxu0 0.0
        %976 = vmatpush.msra.mxu0 0.0
        %977 = vmatpush.msra.mxu0 0.0
        %978 = vmatpush.msra.mxu0 0.0
        %979 = vmatpush.msra.mxu0 0.0
        %980 = vmatpush.msra.mxu0 %v943
        %981 = vmatmul.f32.gmra.mxu0 %v941
        %v982 = vpop.f32.mrf.mxu0
        %v983 = vadd.f32 0.0, %v982
        %984 = vdwg.mxu0
        %v985 = vadd.f32 %v932, %v963
        %v986 = vadd.f32 %v933, %v983
        %v987 = vmul.f32 %v459, %v595
        %v988 = vmul.f32 %v464, %v599
        %v989 = vmul.f32 %v597, 0.0
        %s990 = scalar_lea.vmem %s4, 32
        %v991 = vld [vmem:[%s990] sm:$0xf]
        %995 = vrot.lane.b32.xlu0 %v987, 120
        %v996 = vpop.permute.xlu0 %995
        %997 = vrot.lane.b32.xlu0 %v988, 120
        %v998 = vpop.permute.xlu0 %997
        %999 = vrot.lane.b32.xlu0 %v989, 120
        %v1000 = vpop.permute.xlu0 %999
        %v1001 = vsel %vm617, %v996, %v998
        %v1002 = vsel %vm617, %v998, %v1000
        %v1004 = vsel %vm488, %v991, 0
        %v1006 = vsel %vm492, %v1001, 0
        %v1008 = vsel %vm492, %v1002, 0
        %1010 = vmatpush.msra.mxu0 0.0
        %1011 = vmatpush.msra.mxu0 0.0
        %1012 = vmatpush.msra.mxu0 0.0
        %1013 = vmatpush.msra.mxu0 0.0
        %1014 = vmatpush.msra.mxu0 0.0
        %1015 = vmatpush.msra.mxu0 0.0
        %1016 = vmatpush.msra.mxu0 0.0
        %1017 = vmatpush.msra.mxu0 0.0
        %1018 = vmatpush.msra.mxu0 0.0
        %1019 = vmatpush.msra.mxu0 0.0
        %1020 = vmatpush.msra.mxu0 0.0
        %1021 = vmatpush.msra.mxu0 0.0
        %1022 = vmatpush.msra.mxu0 0.0
        %1023 = vmatpush.msra.mxu0 0.0
        %1024 = vmatpush.msra.mxu0 0.0
        %1025 = vmatpush.msra.mxu0 %v1006
        %1026 = vmatmul.f32.gmra.mxu0 %v1004
        %v1027 = vpop.f32.mrf.mxu0
        %v1028 = vadd.f32 0.0, %v1027
        %1029 = vdwg.mxu0
        %1030 = vmatpush.msra.mxu0 0.0
        %1031 = vmatpush.msra.mxu0 0.0
        %1032 = vmatpush.msra.mxu0 0.0
        %1033 = vmatpush.msra.mxu0 0.0
        %1034 = vmatpush.msra.mxu0 0.0
        %1035 = vmatpush.msra.mxu0 0.0
        %1036 = vmatpush.msra.mxu0 0.0
        %1037 = vmatpush.msra.mxu0 0.0
        %1038 = vmatpush.msra.mxu0 0.0
        %1039 = vmatpush.msra.mxu0 0.0
        %1040 = vmatpush.msra.mxu0 0.0
        %1041 = vmatpush.msra.mxu0 0.0
        %1042 = vmatpush.msra.mxu0 0.0
        %1043 = vmatpush.msra.mxu0 0.0
        %1044 = vmatpush.msra.mxu0 0.0
        %1045 = vmatpush.msra.mxu0 %v1008
        %1046 = vmatmul.f32.gmra.mxu0 %v1004
        %v1047 = vpop.f32.mrf.mxu0
        %v1048 = vadd.f32 0.0, %v1047
        %1049 = vdwg.mxu0
        %v1050 = vadd.f32 %v985, %v1028
        %v1051 = vadd.f32 %v986, %v1048
        %v1052 = vld [vmem:[%s5] sm:$0xf]
        %1054 = vset.pattern.permute.xlu0 0
        %1055 = vperm.xlu0 %1054, %v1052
        %v1056 = vpop.permute.xlu0 %1055
        %v1058 = vadd.f32 %v1050, %v1056
        %v1059 = vadd.f32 %v1051, %v1056
        %v1060 = vmax.f32 %v1058, 0.0
        %v1061 = vmax.f32 %v1059, 0.0
        %1064 = vrot.lane.b32.xlu0 %v1060, 68
        %v1065 = vpop.permute.xlu0 %1064
        %1066 = vrot.lane.b32.xlu0 %v1061, 68
        %v1067 = vpop.permute.xlu0 %1066
        %v1068 = vsel %vm458, %v1065, %v1067
        %v1072 = vsel %vm458, 0.0, %v1065
        %v1073 = vsel %vm458, %v1067, 0.0
        %v1074 = vmul.f32 %v1072, %v470
        %v1075 = vmul.f32 %v1068, %v471
        %v1076 = vld [vmem:[%s6] sm:$0xf]
        %s1077 = scalar_lea.vmem %s6, 4
        %v1078 = vld [vmem:[%s1077] sm:$0xf]
        %1081 = vrot.lane.b32.xlu0 %v1072, 124
        %v1082 = vpop.permute.xlu0 %1081
        %1083 = vrot.lane.b32.xlu0 %v1068, 124
        %v1084 = vpop.permute.xlu0 %1083
        %1085 = vrot.lane.b32.xlu0 %v1073, 124
        %v1086 = vpop.permute.xlu0 %1085
        %v1087 = vsel %vm485, %v1082, %v1084
        %v1088 = vsel %vm485, %v1084, %v1086
        %v1090 = vsel %vm488, %v1078, 0
        %v1092 = vsel %vm492, %v1087, 0
        %v1094 = vsel %vm492, %v1088, 0
        %1096 = vmatpush.msra.mxu0 0.0
        %1097 = vmatpush.msra.mxu0 0.0
        %1098 = vmatpush.msra.mxu0 0.0
        %1099 = vmatpush.msra.mxu0 0.0
        %1100 = vmatpush.msra.mxu0 0.0
        %1101 = vmatpush.msra.mxu0 0.0
        %1102 = vmatpush.msra.mxu0 0.0
        %1103 = vmatpush.msra.mxu0 0.0
        %1104 = vmatpush.msra.mxu0 0.0
        %1105 = vmatpush.msra.mxu0 0.0
        %1106 = vmatpush.msra.mxu0 0.0
        %1107 = vmatpush.msra.mxu0 0.0
        %1108 = vmatpush.msra.mxu0 0.0
        %1109 = vmatpush.msra.mxu0 0.0
        %1110 = vmatpush.msra.mxu0 0.0
        %1111 = vmatpush.msra.mxu0 %v1092
        %1112 = vmatmul.f32.gmra.mxu0 %v1090
        %v1113 = vpop.f32.mrf.mxu0
        %v1114 = vadd.f32 0.0, %v1113
        %1115 = vdwg.mxu0
        %1116 = vmatpush.msra.mxu0 0.0
        %1117 = vmatpush.msra.mxu0 0.0
        %1118 = vmatpush.msra.mxu0 0.0
        %1119 = vmatpush.msra.mxu0 0.0
        %1120 = vmatpush.msra.mxu0 0.0
        %1121 = vmatpush.msra.mxu0 0.0
        %1122 = vmatpush.msra.mxu0 0.0
        %1123 = vmatpush.msra.mxu0 0.0
        %1124 = vmatpush.msra.mxu0 0.0
        %1125 = vmatpush.msra.mxu0 0.0
        %1126 = vmatpush.msra.mxu0 0.0
        %1127 = vmatpush.msra.mxu0 0.0
        %1128 = vmatpush.msra.mxu0 0.0
        %1129 = vmatpush.msra.mxu0 0.0
        %1130 = vmatpush.msra.mxu0 0.0
        %1131 = vmatpush.msra.mxu0 %v1094
        %1132 = vmatmul.f32.gmra.mxu0 %v1090
        %v1133 = vpop.f32.mrf.mxu0
        %v1134 = vadd.f32 0.0, %v1133
        %1135 = vdwg.mxu0
        %v1137 = vsel %vm488, %v1076, 0
        %v1140 = vsel %vm492, %v1074, 0
        %v1143 = vsel %vm492, %v1075, 0
        %1145 = vmatpush.msra.mxu0 0.0
        %1146 = vmatpush.msra.mxu0 0.0
        %1147 = vmatpush.msra.mxu0 0.0
        %1148 = vmatpush.msra.mxu0 0.0
        %1149 = vmatpush.msra.mxu0 0.0
        %1150 = vmatpush.msra.mxu0 0.0
        %1151 = vmatpush.msra.mxu0 0.0
        %1152 = vmatpush.msra.mxu0 0.0
        %1153 = vmatpush.msra.mxu0 0.0
        %1154 = vmatpush.msra.mxu0 0.0
        %1155 = vmatpush.msra.mxu0 0.0
        %1156 = vmatpush.msra.mxu0 0.0
        %1157 = vmatpush.msra.mxu0 0.0
        %1158 = vmatpush.msra.mxu0 0.0
        %1159 = vmatpush.msra.mxu0 0.0
        %1160 = vmatpush.msra.mxu0 %v1140
        %1161 = vmatmul.f32.gmra.mxu0 %v1137
        %v1162 = vpop.f32.mrf.mxu0
        %v1163 = vadd.f32 %v1114, %v1162
        %1164 = vdwg.mxu0
        %1165 = vmatpush.msra.mxu0 0.0
        %1166 = vmatpush.msra.mxu0 0.0
        %1167 = vmatpush.msra.mxu0 0.0
        %1168 = vmatpush.msra.mxu0 0.0
        %1169 = vmatpush.msra.mxu0 0.0
        %1170 = vmatpush.msra.mxu0 0.0
        %1171 = vmatpush.msra.mxu0 0.0
        %1172 = vmatpush.msra.mxu0 0.0
        %1173 = vmatpush.msra.mxu0 0.0
        %1174 = vmatpush.msra.mxu0 0.0
        %1175 = vmatpush.msra.mxu0 0.0
        %1176 = vmatpush.msra.mxu0 0.0
        %1177 = vmatpush.msra.mxu0 0.0
        %1178 = vmatpush.msra.mxu0 0.0
        %1179 = vmatpush.msra.mxu0 0.0
        %1180 = vmatpush.msra.mxu0 %v1143
        %1181 = vmatmul.f32.gmra.mxu0 %v1137
        %v1182 = vpop.f32.mrf.mxu0
        %v1183 = vadd.f32 %v1134, %v1182
        %1184 = vdwg.mxu0
        %v1185 = vmul.f32 %v1072, %v595
        %v1186 = vmul.f32 %v1068, %v599
        %v1187 = vmul.f32 %v1073, %v597
        %s1188 = scalar_lea.vmem %s6, 8
        %v1189 = vld [vmem:[%s1188] sm:$0xf]
        %1193 = vrot.lane.b32.xlu0 %v1185, 120
        %v1194 = vpop.permute.xlu0 %1193
        %1195 = vrot.lane.b32.xlu0 %v1186, 120
        %v1196 = vpop.permute.xlu0 %1195
        %1197 = vrot.lane.b32.xlu0 %v1187, 120
        %v1198 = vpop.permute.xlu0 %1197
        %v1199 = vsel %vm617, %v1194, %v1196
        %v1200 = vsel %vm617, %v1196, %v1198
        %v1202 = vsel %vm488, %v1189, 0
        %v1204 = vsel %vm492, %v1199, 0
        %v1206 = vsel %vm492, %v1200, 0
        %1208 = vmatpush.msra.mxu0 0.0
        %1209 = vmatpush.msra.mxu0 0.0
        %1210 = vmatpush.msra.mxu0 0.0
        %1211 = vmatpush.msra.mxu0 0.0
        %1212 = vmatpush.msra.mxu0 0.0
        %1213 = vmatpush.msra.mxu0 0.0
        %1214 = vmatpush.msra.mxu0 0.0
        %1215 = vmatpush.msra.mxu0 0.0
        %1216 = vmatpush.msra.mxu0 0.0
        %1217 = vmatpush.msra.mxu0 0.0
        %1218 = vmatpush.msra.mxu0 0.0
        %1219 = vmatpush.msra.mxu0 0.0
        %1220 = vmatpush.msra.mxu0 0.0
        %1221 = vmatpush.msra.mxu0 0.0
        %1222 = vmatpush.msra.mxu0 0.0
        %1223 = vmatpush.msra.mxu0 %v1204
        %1224 = vmatmul.f32.gmra.mxu0 %v1202
        %v1225 = vpop.f32.mrf.mxu0
        %v1226 = vadd.f32 0.0, %v1225
        %1227 = vdwg.mxu0
        %1228 = vmatpush.msra.mxu0 0.0
        %1229 = vmatpush.msra.mxu0 0.0
        %1230 = vmatpush.msra.mxu0 0.0
        %1231 = vmatpush.msra.mxu0 0.0
        %1232 = vmatpush.msra.mxu0 0.0
        %1233 = vmatpush.msra.mxu0 0.0
        %1234 = vmatpush.msra.mxu0 0.0
        %1235 = vmatpush.msra.mxu0 0.0
        %1236 = vmatpush.msra.mxu0 0.0
        %1237 = vmatpush.msra.mxu0 0.0
        %1238 = vmatpush.msra.mxu0 0.0
        %1239 = vmatpush.msra.mxu0 0.0
        %1240 = vmatpush.msra.mxu0 0.0
        %1241 = vmatpush.msra.mxu0 0.0
        %1242 = vmatpush.msra.mxu0 0.0
        %1243 = vmatpush.msra.mxu0 %v1206
        %1244 = vmatmul.f32.gmra.mxu0 %v1202
        %v1245 = vpop.f32.mrf.mxu0
        %v1246 = vadd.f32 0.0, %v1245
        %1247 = vdwg.mxu0
        %v1248 = vadd.f32 %v1163, %v1226
        %v1249 = vadd.f32 %v1183, %v1246
        %v1250 = vmul.f32 %v1072, %v672
        %v1251 = vmul.f32 %v1068, %v675
        %v1252 = vmul.f32 %v1073, %v674
        %s1253 = scalar_lea.vmem %s6, 12
        %v1254 = vld [vmem:[%s1253] sm:$0xf]
        %1258 = vrot.lane.b32.xlu0 %v1250, 64
        %v1259 = vpop.permute.xlu0 %1258
        %1260 = vrot.lane.b32.xlu0 %v1251, 64
        %v1261 = vpop.permute.xlu0 %1260
        %1262 = vrot.lane.b32.xlu0 %v1252, 64
        %v1263 = vpop.permute.xlu0 %1262
        %v1264 = vsel %vm406, %v1259, %v1261
        %v1265 = vsel %vm406, %v1261, %v1263
        %v1267 = vsel %vm488, %v1254, 0
        %v1269 = vsel %vm492, %v1264, 0
        %v1271 = vsel %vm492, %v1265, 0
        %1273 = vmatpush.msra.mxu0 0.0
        %1274 = vmatpush.msra.mxu0 0.0
        %1275 = vmatpush.msra.mxu0 0.0
        %1276 = vmatpush.msra.mxu0 0.0
        %1277 = vmatpush.msra.mxu0 0.0
        %1278 = vmatpush.msra.mxu0 0.0
        %1279 = vmatpush.msra.mxu0 0.0
        %1280 = vmatpush.msra.mxu0 0.0
        %1281 = vmatpush.msra.mxu0 0.0
        %1282 = vmatpush.msra.mxu0 0.0
        %1283 = vmatpush.msra.mxu0 0.0
        %1284 = vmatpush.msra.mxu0 0.0
        %1285 = vmatpush.msra.mxu0 0.0
        %1286 = vmatpush.msra.mxu0 0.0
        %1287 = vmatpush.msra.mxu0 0.0
        %1288 = vmatpush.msra.mxu0 %v1269
        %1289 = vmatmul.f32.gmra.mxu0 %v1267
        %v1290 = vpop.f32.mrf.mxu0
        %v1291 = vadd.f32 0.0, %v1290
        %1292 = vdwg.mxu0
        %1293 = vmatpush.msra.mxu0 0.0
        %1294 = vmatpush.msra.mxu0 0.0
        %1295 = vmatpush.msra.mxu0 0.0
        %1296 = vmatpush.msra.mxu0 0.0
        %1297 = vmatpush.msra.mxu0 0.0
        %1298 = vmatpush.msra.mxu0 0.0
        %1299 = vmatpush.msra.mxu0 0.0
        %1300 = vmatpush.msra.mxu0 0.0
        %1301 = vmatpush.msra.mxu0 0.0
        %1302 = vmatpush.msra.mxu0 0.0
        %1303 = vmatpush.msra.mxu0 0.0
        %1304 = vmatpush.msra.mxu0 0.0
        %1305 = vmatpush.msra.mxu0 0.0
        %1306 = vmatpush.msra.mxu0 0.0
        %1307 = vmatpush.msra.mxu0 0.0
        %1308 = vmatpush.msra.mxu0 %v1271
        %1309 = vmatmul.f32.gmra.mxu0 %v1267
        %v1310 = vpop.f32.mrf.mxu0
        %v1311 = vadd.f32 0.0, %v1310
        %1312 = vdwg.mxu0
        %v1313 = vadd.f32 %v1248, %v1291
        %v1314 = vadd.f32 %v1249, %v1311
        %s1315 = scalar_lea.vmem %s6, 16
        %v1316 = vld [vmem:[%s1315] sm:$0xf]
        %1317 = vrot.lane.b32.xlu0 %v1072, 60
        %v1318 = vpop.permute.xlu0 %1317
        %1319 = vrot.lane.b32.xlu0 %v1068, 60
        %v1320 = vpop.permute.xlu0 %1319
        %1321 = vrot.lane.b32.xlu0 %v1073, 60
        %v1322 = vpop.permute.xlu0 %1321
        %v1323 = vsel %vm752, %v1318, %v1320
        %v1324 = vsel %vm752, %v1320, %v1322
        %v1326 = vsel %vm488, %v1316, 0
        %v1328 = vsel %vm492, %v1323, 0
        %v1330 = vsel %vm492, %v1324, 0
        %1332 = vmatpush.msra.mxu0 0.0
        %1333 = vmatpush.msra.mxu0 0.0
        %1334 = vmatpush.msra.mxu0 0.0
        %1335 = vmatpush.msra.mxu0 0.0
        %1336 = vmatpush.msra.mxu0 0.0
        %1337 = vmatpush.msra.mxu0 0.0
        %1338 = vmatpush.msra.mxu0 0.0
        %1339 = vmatpush.msra.mxu0 0.0
        %1340 = vmatpush.msra.mxu0 0.0
        %1341 = vmatpush.msra.mxu0 0.0
        %1342 = vmatpush.msra.mxu0 0.0
        %1343 = vmatpush.msra.mxu0 0.0
        %1344 = vmatpush.msra.mxu0 0.0
        %1345 = vmatpush.msra.mxu0 0.0
        %1346 = vmatpush.msra.mxu0 0.0
        %1347 = vmatpush.msra.mxu0 %v1328
        %1348 = vmatmul.f32.gmra.mxu0 %v1326
        %v1349 = vpop.f32.mrf.mxu0
        %v1350 = vadd.f32 0.0, %v1349
        %1351 = vdwg.mxu0
        %1352 = vmatpush.msra.mxu0 0.0
        %1353 = vmatpush.msra.mxu0 0.0
        %1354 = vmatpush.msra.mxu0 0.0
        %1355 = vmatpush.msra.mxu0 0.0
        %1356 = vmatpush.msra.mxu0 0.0
        %1357 = vmatpush.msra.mxu0 0.0
        %1358 = vmatpush.msra.mxu0 0.0
        %1359 = vmatpush.msra.mxu0 0.0
        %1360 = vmatpush.msra.mxu0 0.0
        %1361 = vmatpush.msra.mxu0 0.0
        %1362 = vmatpush.msra.mxu0 0.0
        %1363 = vmatpush.msra.mxu0 0.0
        %1364 = vmatpush.msra.mxu0 0.0
        %1365 = vmatpush.msra.mxu0 0.0
        %1366 = vmatpush.msra.mxu0 0.0
        %1367 = vmatpush.msra.mxu0 %v1330
        %1368 = vmatmul.f32.gmra.mxu0 %v1326
        %v1369 = vpop.f32.mrf.mxu0
        %v1370 = vadd.f32 0.0, %v1369
        %1371 = vdwg.mxu0
        %v1372 = vadd.f32 %v1313, %v1350
        %v1373 = vadd.f32 %v1314, %v1370
        %v1374 = vmul.f32 %v1072, %v805
        %v1375 = vmul.f32 %v1068, %v809
        %v1376 = vmul.f32 %v1073, %v807
        %s1377 = scalar_lea.vmem %s6, 20
        %v1378 = vld [vmem:[%s1377] sm:$0xf]
        %1382 = vrot.lane.b32.xlu0 %v1374, 56
        %v1383 = vpop.permute.xlu0 %1382
        %1384 = vrot.lane.b32.xlu0 %v1375, 56
        %v1385 = vpop.permute.xlu0 %1384
        %1386 = vrot.lane.b32.xlu0 %v1376, 56
        %v1387 = vpop.permute.xlu0 %1386
        %v1388 = vsel %vm827, %v1383, %v1385
        %v1389 = vsel %vm827, %v1385, %v1387
        %v1391 = vsel %vm488, %v1378, 0
        %v1393 = vsel %vm492, %v1388, 0
        %v1395 = vsel %vm492, %v1389, 0
        %1397 = vmatpush.msra.mxu0 0.0
        %1398 = vmatpush.msra.mxu0 0.0
        %1399 = vmatpush.msra.mxu0 0.0
        %1400 = vmatpush.msra.mxu0 0.0
        %1401 = vmatpush.msra.mxu0 0.0
        %1402 = vmatpush.msra.mxu0 0.0
        %1403 = vmatpush.msra.mxu0 0.0
        %1404 = vmatpush.msra.mxu0 0.0
        %1405 = vmatpush.msra.mxu0 0.0
        %1406 = vmatpush.msra.mxu0 0.0
        %1407 = vmatpush.msra.mxu0 0.0
        %1408 = vmatpush.msra.mxu0 0.0
        %1409 = vmatpush.msra.mxu0 0.0
        %1410 = vmatpush.msra.mxu0 0.0
        %1411 = vmatpush.msra.mxu0 0.0
        %1412 = vmatpush.msra.mxu0 %v1393
        %1413 = vmatmul.f32.gmra.mxu0 %v1391
        %v1414 = vpop.f32.mrf.mxu0
        %v1415 = vadd.f32 0.0, %v1414
        %1416 = vdwg.mxu0
        %1417 = vmatpush.msra.mxu0 0.0
        %1418 = vmatpush.msra.mxu0 0.0
        %1419 = vmatpush.msra.mxu0 0.0
        %1420 = vmatpush.msra.mxu0 0.0
        %1421 = vmatpush.msra.mxu0 0.0
        %1422 = vmatpush.msra.mxu0 0.0
        %1423 = vmatpush.msra.mxu0 0.0
        %1424 = vmatpush.msra.mxu0 0.0
        %1425 = vmatpush.msra.mxu0 0.0
        %1426 = vmatpush.msra.mxu0 0.0
        %1427 = vmatpush.msra.mxu0 0.0
        %1428 = vmatpush.msra.mxu0 0.0
        %1429 = vmatpush.msra.mxu0 0.0
        %1430 = vmatpush.msra.mxu0 0.0
        %1431 = vmatpush.msra.mxu0 0.0
        %1432 = vmatpush.msra.mxu0 %v1395
        %1433 = vmatmul.f32.gmra.mxu0 %v1391
        %v1434 = vpop.f32.mrf.mxu0
        %v1435 = vadd.f32 0.0, %v1434
        %1436 = vdwg.mxu0
        %v1437 = vadd.f32 %v1372, %v1415
        %v1438 = vadd.f32 %v1373, %v1435
        %v1439 = vmul.f32 %v1068, %v470
        %v1440 = vmul.f32 %v1073, %v471
        %s1441 = scalar_lea.vmem %s6, 24
        %v1442 = vld [vmem:[%s1441] sm:$0xf]
        %v1444 = vsel %vm488, %v1442, 0
        %v1447 = vsel %vm492, %v1439, 0
        %v1450 = vsel %vm492, %v1440, 0
        %1452 = vmatpush.msra.mxu0 0.0
        %1453 = vmatpush.msra.mxu0 0.0
        %1454 = vmatpush.msra.mxu0 0.0
        %1455 = vmatpush.msra.mxu0 0.0
        %1456 = vmatpush.msra.mxu0 0.0
        %1457 = vmatpush.msra.mxu0 0.0
        %1458 = vmatpush.msra.mxu0 0.0
        %1459 = vmatpush.msra.mxu0 0.0
        %1460 = vmatpush.msra.mxu0 0.0
        %1461 = vmatpush.msra.mxu0 0.0
        %1462 = vmatpush.msra.mxu0 0.0
        %1463 = vmatpush.msra.mxu0 0.0
        %1464 = vmatpush.msra.mxu0 0.0
        %1465 = vmatpush.msra.mxu0 0.0
        %1466 = vmatpush.msra.mxu0 0.0
        %1467 = vmatpush.msra.mxu0 %v1447
        %1468 = vmatmul.f32.gmra.mxu0 %v1444
        %v1469 = vpop.f32.mrf.mxu0
        %v1470 = vadd.f32 0.0, %v1469
        %1471 = vdwg.mxu0
        %1472 = vmatpush.msra.mxu0 0.0
        %1473 = vmatpush.msra.mxu0 0.0
        %1474 = vmatpush.msra.mxu0 0.0
        %1475 = vmatpush.msra.mxu0 0.0
        %1476 = vmatpush.msra.mxu0 0.0
        %1477 = vmatpush.msra.mxu0 0.0
        %1478 = vmatpush.msra.mxu0 0.0
        %1479 = vmatpush.msra.mxu0 0.0
        %1480 = vmatpush.msra.mxu0 0.0
        %1481 = vmatpush.msra.mxu0 0.0
        %1482 = vmatpush.msra.mxu0 0.0
        %1483 = vmatpush.msra.mxu0 0.0
        %1484 = vmatpush.msra.mxu0 0.0
        %1485 = vmatpush.msra.mxu0 0.0
        %1486 = vmatpush.msra.mxu0 0.0
        %1487 = vmatpush.msra.mxu0 %v1450
        %1488 = vmatmul.f32.gmra.mxu0 %v1444
        %v1489 = vpop.f32.mrf.mxu0
        %v1490 = vadd.f32 0.0, %v1489
        %1491 = vdwg.mxu0
        %v1492 = vadd.f32 %v1437, %v1470
        %v1493 = vadd.f32 %v1438, %v1490
        %s1494 = scalar_lea.vmem %s6, 28
        %v1495 = vld [vmem:[%s1494] sm:$0xf]
        %v1496 = vsel %vm485, %v1086, %v938
        %v1498 = vsel %vm488, %v1495, 0
        %v1500 = vsel %vm492, %v1496, 0
        %1502 = vmatpush.msra.mxu0 0.0
        %1503 = vmatpush.msra.mxu0 0.0
        %1504 = vmatpush.msra.mxu0 0.0
        %1505 = vmatpush.msra.mxu0 0.0
        %1506 = vmatpush.msra.mxu0 0.0
        %1507 = vmatpush.msra.mxu0 0.0
        %1508 = vmatpush.msra.mxu0 0.0
        %1509 = vmatpush.msra.mxu0 0.0
        %1510 = vmatpush.msra.mxu0 0.0
        %1511 = vmatpush.msra.mxu0 0.0
        %1512 = vmatpush.msra.mxu0 0.0
        %1513 = vmatpush.msra.mxu0 0.0
        %1514 = vmatpush.msra.mxu0 0.0
        %1515 = vmatpush.msra.mxu0 0.0
        %1516 = vmatpush.msra.mxu0 0.0
        %1517 = vmatpush.msra.mxu0 %v1094
        %1518 = vmatmul.f32.gmra.mxu0 %v1498
        %v1519 = vpop.f32.mrf.mxu0
        %v1520 = vadd.f32 0.0, %v1519
        %1521 = vdwg.mxu0
        %1522 = vmatpush.msra.mxu0 0.0
        %1523 = vmatpush.msra.mxu0 0.0
        %1524 = vmatpush.msra.mxu0 0.0
        %1525 = vmatpush.msra.mxu0 0.0
        %1526 = vmatpush.msra.mxu0 0.0
        %1527 = vmatpush.msra.mxu0 0.0
        %1528 = vmatpush.msra.mxu0 0.0
        %1529 = vmatpush.msra.mxu0 0.0
        %1530 = vmatpush.msra.mxu0 0.0
        %1531 = vmatpush.msra.mxu0 0.0
        %1532 = vmatpush.msra.mxu0 0.0
        %1533 = vmatpush.msra.mxu0 0.0
        %1534 = vmatpush.msra.mxu0 0.0
        %1535 = vmatpush.msra.mxu0 0.0
        %1536 = vmatpush.msra.mxu0 0.0
        %1537 = vmatpush.msra.mxu0 %v1500
        %1538 = vmatmul.f32.gmra.mxu0 %v1498
        %v1539 = vpop.f32.mrf.mxu0
        %v1540 = vadd.f32 0.0, %v1539
        %1541 = vdwg.mxu0
        %v1542 = vadd.f32 %v1492, %v1520
        %v1543 = vadd.f32 %v1493, %v1540
        %v1544 = vmul.f32 %v1068, %v595
        %v1545 = vmul.f32 %v1073, %v599
        %s1546 = scalar_lea.vmem %s6, 32
        %v1547 = vld [vmem:[%s1546] sm:$0xf]
        %1550 = vrot.lane.b32.xlu0 %v1544, 120
        %v1551 = vpop.permute.xlu0 %1550
        %1552 = vrot.lane.b32.xlu0 %v1545, 120
        %v1553 = vpop.permute.xlu0 %1552
        %v1554 = vsel %vm617, %v1551, %v1553
        %v1555 = vsel %vm617, %v1553, %v1000
        %v1557 = vsel %vm488, %v1547, 0
        %v1559 = vsel %vm492, %v1554, 0
        %v1561 = vsel %vm492, %v1555, 0
        %1563 = vmatpush.msra.mxu0 0.0
        %1564 = vmatpush.msra.mxu0 0.0
        %1565 = vmatpush.msra.mxu0 0.0
        %1566 = vmatpush.msra.mxu0 0.0
        %1567 = vmatpush.msra.mxu0 0.0
        %1568 = vmatpush.msra.mxu0 0.0
        %1569 = vmatpush.msra.mxu0 0.0
        %1570 = vmatpush.msra.mxu0 0.0
        %1571 = vmatpush.msra.mxu0 0.0
        %1572 = vmatpush.msra.mxu0 0.0
        %1573 = vmatpush.msra.mxu0 0.0
        %1574 = vmatpush.msra.mxu0 0.0
        %1575 = vmatpush.msra.mxu0 0.0
        %1576 = vmatpush.msra.mxu0 0.0
        %1577 = vmatpush.msra.mxu0 0.0
        %1578 = vmatpush.msra.mxu0 %v1559
        %1579 = vmatmul.f32.gmra.mxu0 %v1557
        %v1580 = vpop.f32.mrf.mxu0
        %v1581 = vadd.f32 0.0, %v1580
        %1582 = vdwg.mxu0
        %1583 = vmatpush.msra.mxu0 0.0
        %1584 = vmatpush.msra.mxu0 0.0
        %1585 = vmatpush.msra.mxu0 0.0
        %1586 = vmatpush.msra.mxu0 0.0
        %1587 = vmatpush.msra.mxu0 0.0
        %1588 = vmatpush.msra.mxu0 0.0
        %1589 = vmatpush.msra.mxu0 0.0
        %1590 = vmatpush.msra.mxu0 0.0
        %1591 = vmatpush.msra.mxu0 0.0
        %1592 = vmatpush.msra.mxu0 0.0
        %1593 = vmatpush.msra.mxu0 0.0
        %1594 = vmatpush.msra.mxu0 0.0
        %1595 = vmatpush.msra.mxu0 0.0
        %1596 = vmatpush.msra.mxu0 0.0
        %1597 = vmatpush.msra.mxu0 0.0
        %1598 = vmatpush.msra.mxu0 %v1561
        %1599 = vmatmul.f32.gmra.mxu0 %v1557
        %v1600 = vpop.f32.mrf.mxu0
        %v1601 = vadd.f32 0.0, %v1600
        %1602 = vdwg.mxu0
        %v1603 = vadd.f32 %v1542, %v1581
        %v1604 = vadd.f32 %v1543, %v1601
        %v1605 = vld [vmem:[%s7] sm:$0xf]
        %1607 = vset.pattern.permute.xlu0 0
        %1608 = vperm.xlu0 %1607, %v1605
        %v1609 = vpop.permute.xlu0 %1608
        %v1611 = vadd.f32 %v1603, %v1609
        %v1612 = vadd.f32 %v1604, %v1609
        %v1613 = vmax.f32 %v1611, 0.0
        %v1614 = vmax.f32 %v1612, 0.0
        %v1615 = vld [vmem:[%s8] sm:$0x1]
        %v1616 = vld [vmem:[#allocation2] sm:$0x1]
        %1618 = vset.pattern.permute.xlu0 0
        %1619 = vperm.xlu0 %1618, %v1616
        %v1620 = vpop.permute.xlu0 %1619
        %v1622 = vperm.slane %v1620, 0
        %v1624 = vsel %vm488, %v1615, 0
        %v1627 = vsel %vm492, %v1613, 0
        %v1630 = vsel %vm492, %v1614, 0
        %1632 = vmatpush.msra.mxu0 0.0
        %1633 = vmatpush.msra.mxu0 0.0
        %1634 = vmatpush.msra.mxu0 0.0
        %1635 = vmatpush.msra.mxu0 0.0
        %1636 = vmatpush.msra.mxu0 0.0
        %1637 = vmatpush.msra.mxu0 0.0
        %1638 = vmatpush.msra.mxu0 0.0
        %1639 = vmatpush.msra.mxu0 0.0
        %1640 = vmatpush.msra.mxu0 0.0
        %1641 = vmatpush.msra.mxu0 0.0
        %1642 = vmatpush.msra.mxu0 0.0
        %1643 = vmatpush.msra.mxu0 0.0
        %1644 = vmatpush.msra.mxu0 0.0
        %1645 = vmatpush.msra.mxu0 0.0
        %1646 = vmatpush.msra.mxu0 0.0
        %1647 = vmatpush.msra.mxu0 %v1627
        %1648 = vmatmul.f32.gmra.mxu0 %v1624
        %v1649 = vpop.f32.mrf.mxu0
        %v1650 = vadd.f32 %v1622, %v1649
        %1651 = vdwg.mxu0
        %1652 = vmatpush.msra.mxu0 0.0
        %1653 = vmatpush.msra.mxu0 0.0
        %1654 = vmatpush.msra.mxu0 0.0
        %1655 = vmatpush.msra.mxu0 0.0
        %1656 = vmatpush.msra.mxu0 0.0
        %1657 = vmatpush.msra.mxu0 0.0
        %1658 = vmatpush.msra.mxu0 0.0
        %1659 = vmatpush.msra.mxu0 0.0
        %1660 = vmatpush.msra.mxu0 0.0
        %1661 = vmatpush.msra.mxu0 0.0
        %1662 = vmatpush.msra.mxu0 0.0
        %1663 = vmatpush.msra.mxu0 0.0
        %1664 = vmatpush.msra.mxu0 0.0
        %1665 = vmatpush.msra.mxu0 0.0
        %1666 = vmatpush.msra.mxu0 0.0
        %1667 = vmatpush.msra.mxu0 %v1630
        %1668 = vmatmul.f32.gmra.mxu0 %v1624
        %v1669 = vpop.f32.mrf.mxu0
        %v1670 = vadd.f32 %v1622, %v1669
        %1671 = vdwg.mxu0
        %v1672 = vmax.f32 %v1650, 0.0
        %v1673 = vmax.f32 %v1670, 0.0
        %v1676 = vrot.slane %v1673, 7
        %vm1677 = vcmask 1040384
        %v1678 = vsel %vm1677, %v1672, %v1676
        %v1680 = vlaneseq
        %vm1681 = vcmp.ge.s32.totalorder %v1680, 0
        %vm1682 = vcmp.lt.s32.totalorder %v1680, 256
        %vm1683 = vmand %vm1681, %vm1682
        %1684 = vst.msk [vmem:[%s381] sm:$0x3] %vm1683, %v1678
        %s1685 = sand.u32 %s252, 1
        %s1686 = scalar_lea.sflag [#allocation5], %s1685
        %s1687 = sand.u32 %s252, 1
        %s1688 = smul.addr %s1687, 2
        %s1689 = scalar_lea.vmem [#allocation6], %s1688
        // Predicated region
        $region65: #{tpu_custom_call.1} parent=59 // pred_check
          %p1690 = pneg %p262
        $region66: #{tpu_custom_call.1} parent=59 // pred_check_branch
          %1692 = sbr.rel (%p1690) target = $region68
        $region67: #{tpu_custom_call.1} parent=59 // pred_region
          %1694 = vsyncadd %s1686, 0
          %s1695 = smul.addr %s29, 2
          %s1696 = scalar_lea.hbm %s10, %s1695
          %s1698 = sshll.u32 %s1689, 4
          %s1699 = int_to_ptr.vmem [resolvable:$true] %s1698
          %s1700 = sshll.u32 %s1696, 4
          %s1701 = int_to_ptr.hbm [resolvable:$true] %s1700
          %1703 = dma.vmem_to_hbm [thread:$0]  %s1699, 32, %s1701, %s1686
        $region68: #{tpu_custom_call.1} parent=59 // pred_fallthru
          _
      $region60: #{tpu_custom_call.1} parent=5 // pred_fallthru
        _
      %p1704 = scmp.le.s32.totalorder 2, %s24
      // Predicated region
      $region69: #{tpu_custom_call.1} parent=5 // pred_check
        %p1705 = pneg %p1704
      $region70: #{tpu_custom_call.1} parent=5 // pred_check_branch
        %1707 = sbr.rel (%p1705) target = $region72
      $region71: #{tpu_custom_call.1} parent=5 // pred_region
        %s1708 = ssub.s32 %s24, 2
        // Predicated region
        $region73: #{tpu_custom_call.1} parent=71 // pred_check
          %p1709 = pneg %p268
        $region74: #{tpu_custom_call.1} parent=71 // pred_check_branch
          %1711 = sbr.rel (%p1709) target = $region76
        $region75: #{tpu_custom_call.1} parent=71 // pred_region
          %s1712 = sand.u32 %s253, 1
          %s1713 = scalar_lea.sflag [#allocation5], %s1712
          %s1714 = sand.u32 %s253, 1
          %s1715 = smul.addr %s1714, 2
          %s1716 = scalar_lea.vmem [#allocation6], %s1715
          %1718 = dma.done %s1713, 32
        $region76: #{tpu_custom_call.1} parent=71 // pred_fallthru
          _
      $region72: #{tpu_custom_call.1} parent=5 // pred_fallthru
        _
    $region6: #{tpu_custom_call.1} parent=1 // loop_footer
      %s28 = sadd.s32 1, %s24
    $region7: #{tpu_custom_call.1} parent=1 // loop_footer_branch
      %23 = sbr.rel target = $region3
    $region8: #{tpu_custom_call.1} parent=1 // loop_exit
      _
    %1719 = vsyncpa [#allocation4], 1
    %s1720 = scalar_lea.sflag [#allocation4], 1
    %1721 = vsyncpa %s1720, 1
    %1722 = vsyncpa [#allocation5], 1
    %s1723 = scalar_lea.sflag [#allocation5], 1
    %1724 = vsyncpa %s1723, 1

</llo_original>
